<compile_context>
chip_gen: v5e
topology: v5e:2x2
jax: 0.10.0
libtpu: 0.0.40
codegen_flags: <defaults>
</compile_context>

<pallas_src>
import math
import functools

import jax
import jax.numpy as jnp
from jax import lax
from jax.experimental import pallas as pl
from jax.experimental.pallas import tpu as pltpu


def _mha_kernel(*refs, h, d_k, has_mask):
    if has_mask:
        (xq_ref, xk_ref, xv_ref,
         wq_ref, bq_ref, wk_ref, bk_ref, wv_ref, bv_ref, wo_ref, bo_ref,
         bias_ref, o_ref, cat_ref) = refs
    else:
        (xq_ref, xk_ref, xv_ref,
         wq_ref, bq_ref, wk_ref, bk_ref, wv_ref, bv_ref, wo_ref, bo_ref,
         o_ref, cat_ref) = refs
        bias_ref = None

    xq = xq_ref[0]          # (S, D)
    xk = xk_ref[0]          # (S, D)
    xv = xv_ref[0]          # (S, D)

    # Full-width projections: (S, D) @ (D, D), f32 accumulation on the MXU.
    # (1/sqrt(d_k) is already folded into wq/bq on the host.)
    q = jnp.dot(xq, wq_ref[...], preferred_element_type=jnp.float32) + bq_ref[...]
    k = jnp.dot(xk, wk_ref[...], preferred_element_type=jnp.float32) + bk_ref[...]
    v = jnp.dot(xv, wv_ref[...], preferred_element_type=jnp.float32) + bv_ref[...]

    if has_mask:
        bias = bias_ref[0]  # (S, S) additive bias: 0 where kept, -1e9 where masked.

    # Static (unrolled) loop over heads; h is a small compile-time constant.
    for i in range(h):
        lo = i * d_k
        qh = q[:, lo:lo + d_k]          # (S, d_k)
        kh = k[:, lo:lo + d_k]          # (S, d_k)
        vh = v[:, lo:lo + d_k]          # (S, d_k)

        # q_h @ k_h^T without materializing the transpose (NT dot_general).
        s = lax.dot_general(qh, kh, (((1,), (1,)), ((), ())),
                            preferred_element_type=jnp.float32)   # (S, S)
        if has_mask:
            s = s + bias

        # Numerically-stable softmax with deferred normalization.
        m = jnp.max(s, axis=-1, keepdims=True)
        e = jnp.exp(s - m)                                         # (S, S)
        l = jnp.sum(e, axis=-1, keepdims=True)                     # (S, 1)
        oh = jnp.dot(e, vh, preferred_element_type=jnp.float32)    # (S, d_k)
        # Normalize on the small (S, d_k) output, not the (S, S) matrix.
        cat_ref[:, lo:lo + d_k] = oh * (1.0 / l)

    # Single output projection over the concatenated heads: (S, D) @ (D, D).
    y = jnp.dot(cat_ref[...], wo_ref[...],
                preferred_element_type=jnp.float32) + bo_ref[...]
    o_ref[0] = y.astype(o_ref.dtype)


def _vmem_bytes_estimate(S, D, itemsize, has_mask):
    """Rough per-step VMEM footprint estimate (inputs double-buffered + intermediates)."""
    weights = 4 * D * D * itemsize * 2
    acts = 3 * S * D * itemsize * 2
    biases = 4 * D * itemsize * 2
    mask = (S * S * 4 * 2) if has_mask else 0
    out = S * D * itemsize * 2
    inter = 3 * S * D * 4 + 3 * S * S * 4 + 2 * S * D * 4
    return weights + acts + biases + mask + out + inter


def multi_headed_attention(params, query, key, value, mask=None, *, h):
    """params: dict with Wq,Wk,Wv,Wo of shape (D, D) (PyTorch Linear weight, out x in)
    and bq,bk,bv,bo of shape (D,).  query/key/value: (B, S, D).  mask: (B, S, S) or None."""
    B, S, D = query.shape
    assert D % h == 0
    d_k = D // h
    scale = 1.0 / math.sqrt(d_k)
    dt = query.dtype

    # Host-side glue: transpose PyTorch (out, in) weights to x @ W form and fold the
    # attention scale into the query projection. (For bf16 inputs, weights follow dtype.)
    wq = (jnp.transpose(params["Wq"]) * scale).astype(dt)          # (D, D)
    bq = (params["bq"] * scale).reshape(1, D).astype(dt)
    wk = jnp.transpose(params["Wk"]).astype(dt)
    bk = params["bk"].reshape(1, D).astype(dt)
    wv = jnp.transpose(params["Wv"]).astype(dt)
    bv = params["bv"].reshape(1, D).astype(dt)
    wo = jnp.transpose(params["Wo"]).astype(dt)                    # (D, D), head-major rows
    bo = params["bo"].reshape(1, D).astype(dt)

    has_mask = mask is not None

    operands = [query, key, value, wq, bq, wk, bk, wv, bv, wo, bo]
    in_specs = [
        pl.BlockSpec((1, S, D), lambda b: (b, 0, 0)),    # query
        pl.BlockSpec((1, S, D), lambda b: (b, 0, 0)),    # key
        pl.BlockSpec((1, S, D), lambda b: (b, 0, 0)),    # value
        pl.BlockSpec((D, D), lambda b: (0, 0)),          # Wq (resident)
        pl.BlockSpec((1, D), lambda b: (0, 0)),          # bq
        pl.BlockSpec((D, D), lambda b: (0, 0)),          # Wk (resident)
        pl.BlockSpec((1, D), lambda b: (0, 0)),          # bk
        pl.BlockSpec((D, D), lambda b: (0, 0)),          # Wv (resident)
        pl.BlockSpec((1, D), lambda b: (0, 0)),          # bv
        pl.BlockSpec((D, D), lambda b: (0, 0)),          # Wo (resident)
        pl.BlockSpec((1, D), lambda b: (0, 0)),          # bo
    ]
    if has_mask:
        # Additive f32 bias: 0 where attended, -1e9 where masked (matches masked_fill).
        bias = jnp.where(mask == 0, jnp.float32(-1e9), jnp.float32(0.0))
        operands.append(bias)
        in_specs.append(pl.BlockSpec((1, S, S), lambda b: (b, 0, 0)))

    cp_kwargs = dict(dimension_semantics=("parallel",))
    est = _vmem_bytes_estimate(S, D, jnp.dtype(dt).itemsize, has_mask)
    if est > (12 << 20):
        # Raise the scoped VMEM limit only when the default would be too small.
        cp_kwargs["vmem_limit_bytes"] = min(int(est * 1.5) + (4 << 20), 64 << 20)

    kernel = functools.partial(_mha_kernel, h=h, d_k=d_k, has_mask=has_mask)

    out = pl.pallas_call(
        kernel,
        out_shape=jax.ShapeDtypeStruct((B, S, D), dt),
        grid_spec=pltpu.PrefetchScalarGridSpec(
            num_scalar_prefetch=0,
            grid=(B,),
            in_specs=in_specs,
            out_specs=pl.BlockSpec((1, S, D), lambda b: (b, 0, 0)),
            scratch_shapes=[pltpu.VMEM((S, D), jnp.float32)],   # concat of head outputs
        ),
        compiler_params=pltpu.CompilerParams(**cp_kwargs),
    )(*operands)
    return out


def _reference_mha(params, query, key, value, mask, h):
    """Pure-JAX reference mirroring the PyTorch forward, for a correctness check."""
    B, S, D = query.shape
    d_k = D // h

    def lin(x, W, b):
        return x @ W.T + b

    q = lin(query, params["Wq"], params["bq"]).reshape(B, S, h, d_k).transpose(0, 2, 1, 3)
    k = lin(key,   params["Wk"], params["bk"]).reshape(B, S, h, d_k).transpose(0, 2, 1, 3)
    v = lin(value, params["Wv"], params["bv"]).reshape(B, S, h, d_k).transpose(0, 2, 1, 3)
    scores = jnp.einsum("bhqd,bhkd->bhqk", q, k) / math.sqrt(d_k)
    if mask is not None:
        scores = jnp.where(mask[:, None, :, :] == 0, -1e9, scores)
    p = jax.nn.softmax(scores, axis=-1)
    x = jnp.einsum("bhqk,bhkd->bhqd", p, v).transpose(0, 2, 1, 3).reshape(B, S, D)
    return lin(x, params["Wo"], params["bo"])


def _init_params(key, d_model):
    ks = jax.random.split(key, 8)
    bound = 1.0 / math.sqrt(d_model)
    u = lambda k, shape: jax.random.uniform(k, shape, jnp.float32, -bound, bound)
    return {
        "Wq": u(ks[0], (d_model, d_model)), "bq": u(ks[1], (d_model,)),
        "Wk": u(ks[2], (d_model, d_model)), "bk": u(ks[3], (d_model,)),
        "Wv": u(ks[4], (d_model, d_model)), "bv": u(ks[5], (d_model,)),
        "Wo": u(ks[6], (d_model, d_model)), "bo": u(ks[7], (d_model,)),
    }


if __name__ == "__main__":
    # --- Test 1: lane-dense d_model (multiple of 128), no mask (mask-free kernel variant).
    B, S, d_model, h = 2, 16, 128, 4
    root = jax.random.PRNGKey(0)
    kp, kq, kk, kv = jax.random.split(root, 4)
    params = _init_params(kp, d_model)
    query = jax.random.normal(kq, (B, S, d_model), jnp.float32)
    key = jax.random.normal(kk, (B, S, d_model), jnp.float32)
    value = jax.random.normal(kv, (B, S, d_model), jnp.float32)

    out = multi_headed_attention(params, query, key, value, None, h=h)
    out = jax.block_until_ready(out)
    ref = _reference_mha(params, query, key, value, None, h)
    assert out.shape == (B, S, d_model)
    assert jnp.allclose(out, ref, atol=1e-4, rtol=1e-4)

    # --- Test 2: small shapes with a causal mask (exercises the masked kernel variant).
    B2, S2, D2, h2 = 2, 8, 32, 4
    ks2 = jax.random.split(jax.random.PRNGKey(1), 4)
    params2 = _init_params(ks2[0], D2)
    q2 = jax.random.normal(ks2[1], (B2, S2, D2), jnp.float32)
    k2 = jax.random.normal(ks2[2], (B2, S2, D2), jnp.float32)
    v2 = jax.random.normal(ks2[3], (B2, S2, D2), jnp.float32)
    mask2 = jnp.broadcast_to(jnp.tril(jnp.ones((S2, S2), jnp.int32)), (B2, S2, S2))

    out2 = multi_headed_attention(params2, q2, k2, v2, mask2, h=h2)
    out2 = jax.block_until_ready(out2)
    ref2 = _reference_mha(params2, q2, k2, v2, mask2, h2)
    assert out2.shape == (B2, S2, D2)
    assert jnp.allclose(out2, ref2, atol=1e-4, rtol=1e-4)

    print("KERNEL_OK")
</pallas_src>

<mosaic_0001>
module attributes {stable_mosaic.version = 11 : i64} {
  func.func @_mha_kernel(%arg0: i32, %arg1: memref<1x16x128xf32, #tpu.memory_space<vmem>>, %arg2: memref<1x16x128xf32, #tpu.memory_space<vmem>>, %arg3: memref<1x16x128xf32, #tpu.memory_space<vmem>>, %arg4: memref<128x128xf32, #tpu.memory_space<vmem>>, %arg5: memref<1x128xf32, #tpu.memory_space<vmem>>, %arg6: memref<128x128xf32, #tpu.memory_space<vmem>>, %arg7: memref<1x128xf32, #tpu.memory_space<vmem>>, %arg8: memref<128x128xf32, #tpu.memory_space<vmem>>, %arg9: memref<1x128xf32, #tpu.memory_space<vmem>>, %arg10: memref<128x128xf32, #tpu.memory_space<vmem>>, %arg11: memref<1x128xf32, #tpu.memory_space<vmem>>, %arg12: memref<1x16x128xf32, #tpu.memory_space<vmem>>, %arg13: memref<16x128xf32, #tpu.memory_space<vmem>>) attributes {dimension_semantics = [#tpu.dimension_semantics<parallel>], iteration_bounds = array<i64: 2>, scalar_prefetch = 0 : i64, scratch_operands = 1 : i64, tpu.core_type = #tpu.core_type<tc>, window_params = [{transform_indices = @transform_0, window_bounds = array<i64: 1, 16, 128>}, {transform_indices = @transform_1, window_bounds = array<i64: 1, 16, 128>}, {transform_indices = @transform_2, window_bounds = array<i64: 1, 16, 128>}, {pipeline_mode = #tpu.pipeline_mode<synchronous>, transform_indices = @transform_3, window_bounds = array<i64: 128, 128>}, {pipeline_mode = #tpu.pipeline_mode<synchronous>, transform_indices = @transform_4, window_bounds = array<i64: 1, 128>}, {pipeline_mode = #tpu.pipeline_mode<synchronous>, transform_indices = @transform_5, window_bounds = array<i64: 128, 128>}, {pipeline_mode = #tpu.pipeline_mode<synchronous>, transform_indices = @transform_6, window_bounds = array<i64: 1, 128>}, {pipeline_mode = #tpu.pipeline_mode<synchronous>, transform_indices = @transform_7, window_bounds = array<i64: 128, 128>}, {pipeline_mode = #tpu.pipeline_mode<synchronous>, transform_indices = @transform_8, window_bounds = array<i64: 1, 128>}, {pipeline_mode = #tpu.pipeline_mode<synchronous>, transform_indices = @transform_9, window_bounds = array<i64: 128, 128>}, {pipeline_mode = #tpu.pipeline_mode<synchronous>, transform_indices = @transform_10, window_bounds = array<i64: 1, 128>}, {transform_indices = @transform_11, window_bounds = array<i64: 1, 16, 128>}]} {
    %c0 = arith.constant 0 : index
    %c0_0 = arith.constant 0 : index
    %c0_1 = arith.constant 0 : index
    %0 = vector.load %arg1[%c0, %c0_0, %c0_1] : memref<1x16x128xf32, #tpu.memory_space<vmem>>, vector<1x16x128xf32>
    %1 = vector.shape_cast %0 : vector<1x16x128xf32> to vector<16x128xf32>
    %c0_2 = arith.constant 0 : index
    %c0_3 = arith.constant 0 : index
    %c0_4 = arith.constant 0 : index
    %2 = vector.load %arg2[%c0_2, %c0_3, %c0_4] : memref<1x16x128xf32, #tpu.memory_space<vmem>>, vector<1x16x128xf32>
    %3 = vector.shape_cast %2 : vector<1x16x128xf32> to vector<16x128xf32>
    %c0_5 = arith.constant 0 : index
    %c0_6 = arith.constant 0 : index
    %c0_7 = arith.constant 0 : index
    %4 = vector.load %arg3[%c0_5, %c0_6, %c0_7] : memref<1x16x128xf32, #tpu.memory_space<vmem>>, vector<1x16x128xf32>
    %5 = vector.shape_cast %4 : vector<1x16x128xf32> to vector<16x128xf32>
    %c0_8 = arith.constant 0 : index
    %c0_9 = arith.constant 0 : index
    %6 = vector.load %arg4[%c0_8, %c0_9] : memref<128x128xf32, #tpu.memory_space<vmem>>, vector<128x128xf32>
    %cst = arith.constant dense<0.000000e+00> : vector<16x128xf32>
    %7 = tpu.matmul %1, %6, %cst {dimension_numbers = #tpu.dot_dimension_numbers<[1], [0], [0], [1], [0, 0, 1, 1], [], []>} : vector<16x128xf32>, vector<128x128xf32>, vector<16x128xf32> -> vector<16x128xf32>
    %c0_10 = arith.constant 0 : index
    %c0_11 = arith.constant 0 : index
    %8 = vector.load %arg5[%c0_10, %c0_11] : memref<1x128xf32, #tpu.memory_space<vmem>>, vector<1x128xf32>
    %9 = vector.broadcast %8 : vector<1x128xf32> to vector<16x128xf32>
    %10 = arith.addf %7, %9 : vector<16x128xf32>
    %c0_12 = arith.constant 0 : index
    %c0_13 = arith.constant 0 : index
    %11 = vector.load %arg6[%c0_12, %c0_13] : memref<128x128xf32, #tpu.memory_space<vmem>>, vector<128x128xf32>
    %cst_14 = arith.constant dense<0.000000e+00> : vector<16x128xf32>
    %12 = tpu.matmul %3, %11, %cst_14 {dimension_numbers = #tpu.dot_dimension_numbers<[1], [0], [0], [1], [0, 0, 1, 1], [], []>} : vector<16x128xf32>, vector<128x128xf32>, vector<16x128xf32> -> vector<16x128xf32>
    %c0_15 = arith.constant 0 : index
    %c0_16 = arith.constant 0 : index
    %13 = vector.load %arg7[%c0_15, %c0_16] : memref<1x128xf32, #tpu.memory_space<vmem>>, vector<1x128xf32>
    %14 = vector.broadcast %13 : vector<1x128xf32> to vector<16x128xf32>
    %15 = arith.addf %12, %14 : vector<16x128xf32>
    %c0_17 = arith.constant 0 : index
    %c0_18 = arith.constant 0 : index
    %16 = vector.load %arg8[%c0_17, %c0_18] : memref<128x128xf32, #tpu.memory_space<vmem>>, vector<128x128xf32>
    %cst_19 = arith.constant dense<0.000000e+00> : vector<16x128xf32>
    %17 = tpu.matmul %5, %16, %cst_19 {dimension_numbers = #tpu.dot_dimension_numbers<[1], [0], [0], [1], [0, 0, 1, 1], [], []>} : vector<16x128xf32>, vector<128x128xf32>, vector<16x128xf32> -> vector<16x128xf32>
    %c0_20 = arith.constant 0 : index
    %c0_21 = arith.constant 0 : index
    %18 = vector.load %arg9[%c0_20, %c0_21] : memref<1x128xf32, #tpu.memory_space<vmem>>, vector<1x128xf32>
    %19 = vector.broadcast %18 : vector<1x128xf32> to vector<16x128xf32>
    %20 = arith.addf %17, %19 : vector<16x128xf32>
    %21 = vector.extract_strided_slice %10 {offsets = [0, 0], sizes = [16, 32], strides = [1, 1]} : vector<16x128xf32> to vector<16x32xf32>
    %22 = vector.extract_strided_slice %15 {offsets = [0, 0], sizes = [16, 32], strides = [1, 1]} : vector<16x128xf32> to vector<16x32xf32>
    %23 = vector.extract_strided_slice %20 {offsets = [0, 0], sizes = [16, 32], strides = [1, 1]} : vector<16x128xf32> to vector<16x32xf32>
    %cst_22 = arith.constant dense<0.000000e+00> : vector<16x16xf32>
    %24 = tpu.matmul %21, %22, %cst_22 {dimension_numbers = #tpu.dot_dimension_numbers<[1], [1], [0], [0], [0, 0, 1, 0], [], []>} : vector<16x32xf32>, vector<16x32xf32>, vector<16x16xf32> -> vector<16x16xf32>
    %cst_23 = arith.constant dense<0xFF800000> : vector<16xf32>
    %25 = vector.multi_reduction <maximumf>, %24, %cst_23 [1] : vector<16x16xf32> to vector<16xf32>
    %26 = vector.shape_cast %25 : vector<16xf32> to vector<16x1xf32>
    %27 = vector.broadcast %26 : vector<16x1xf32> to vector<16x16xf32>
    %28 = arith.subf %24, %27 : vector<16x16xf32>
    %29 = math.exp %28 : vector<16x16xf32>
    %cst_24 = arith.constant dense<0.000000e+00> : vector<16xf32>
    %30 = vector.multi_reduction <add>, %29, %cst_24 [1] : vector<16x16xf32> to vector<16xf32>
    %31 = vector.shape_cast %30 : vector<16xf32> to vector<16x1xf32>
    %cst_25 = arith.constant dense<0.000000e+00> : vector<16x32xf32>
    %32 = tpu.matmul %29, %23, %cst_25 {dimension_numbers = #tpu.dot_dimension_numbers<[1], [0], [0], [1], [0, 0, 1, 1], [], []>} : vector<16x16xf32>, vector<16x32xf32>, vector<16x32xf32> -> vector<16x32xf32>
    %cst_26 = arith.constant 1.000000e+00 : f32
    %33 = vector.broadcast %cst_26 : f32 to vector<16x1xf32>
    %34 = arith.divf %33, %31 : vector<16x1xf32>
    %35 = vector.broadcast %34 : vector<16x1xf32> to vector<16x32xf32>
    %36 = arith.mulf %32, %35 : vector<16x32xf32>
    %c0_27 = arith.constant 0 : index
    %c0_28 = arith.constant 0 : index
    %37 = vector.load %arg13[%c0_27, %c0_28] : memref<16x128xf32, #tpu.memory_space<vmem>>, vector<16x32xf32>
    tpu.vector_store %arg13[%c0_27, %c0_28], %36 {strides = array<i32>} : memref<16x128xf32, #tpu.memory_space<vmem>>, vector<16x32xf32>,
    %38 = vector.extract_strided_slice %10 {offsets = [0, 32], sizes = [16, 32], strides = [1, 1]} : vector<16x128xf32> to vector<16x32xf32>
    %39 = vector.extract_strided_slice %15 {offsets = [0, 32], sizes = [16, 32], strides = [1, 1]} : vector<16x128xf32> to vector<16x32xf32>
    %40 = vector.extract_strided_slice %20 {offsets = [0, 32], sizes = [16, 32], strides = [1, 1]} : vector<16x128xf32> to vector<16x32xf32>
    %cst_29 = arith.constant dense<0.000000e+00> : vector<16x16xf32>
    %41 = tpu.matmul %38, %39, %cst_29 {dimension_numbers = #tpu.dot_dimension_numbers<[1], [1], [0], [0], [0, 0, 1, 0], [], []>} : vector<16x32xf32>, vector<16x32xf32>, vector<16x16xf32> -> vector<16x16xf32>
    %cst_30 = arith.constant dense<0xFF800000> : vector<16xf32>
    %42 = vector.multi_reduction <maximumf>, %41, %cst_30 [1] : vector<16x16xf32> to vector<16xf32>
    %43 = vector.shape_cast %42 : vector<16xf32> to vector<16x1xf32>
    %44 = vector.broadcast %43 : vector<16x1xf32> to vector<16x16xf32>
    %45 = arith.subf %41, %44 : vector<16x16xf32>
    %46 = math.exp %45 : vector<16x16xf32>
    %cst_31 = arith.constant dense<0.000000e+00> : vector<16xf32>
    %47 = vector.multi_reduction <add>, %46, %cst_31 [1] : vector<16x16xf32> to vector<16xf32>
    %48 = vector.shape_cast %47 : vector<16xf32> to vector<16x1xf32>
    %cst_32 = arith.constant dense<0.000000e+00> : vector<16x32xf32>
    %49 = tpu.matmul %46, %40, %cst_32 {dimension_numbers = #tpu.dot_dimension_numbers<[1], [0], [0], [1], [0, 0, 1, 1], [], []>} : vector<16x16xf32>, vector<16x32xf32>, vector<16x32xf32> -> vector<16x32xf32>
    %cst_33 = arith.constant 1.000000e+00 : f32
    %50 = vector.broadcast %cst_33 : f32 to vector<16x1xf32>
    %51 = arith.divf %50, %48 : vector<16x1xf32>
    %52 = vector.broadcast %51 : vector<16x1xf32> to vector<16x32xf32>
    %53 = arith.mulf %49, %52 : vector<16x32xf32>
    %c0_34 = arith.constant 0 : index
    %c32 = arith.constant 32 : index
    %54 = vector.load %arg13[%c0_34, %c32] : memref<16x128xf32, #tpu.memory_space<vmem>>, vector<16x32xf32>
    tpu.vector_store %arg13[%c0_34, %c32], %53 {strides = array<i32>} : memref<16x128xf32, #tpu.memory_space<vmem>>, vector<16x32xf32>,
    %55 = vector.extract_strided_slice %10 {offsets = [0, 64], sizes = [16, 32], strides = [1, 1]} : vector<16x128xf32> to vector<16x32xf32>
    %56 = vector.extract_strided_slice %15 {offsets = [0, 64], sizes = [16, 32], strides = [1, 1]} : vector<16x128xf32> to vector<16x32xf32>
    %57 = vector.extract_strided_slice %20 {offsets = [0, 64], sizes = [16, 32], strides = [1, 1]} : vector<16x128xf32> to vector<16x32xf32>
    %cst_35 = arith.constant dense<0.000000e+00> : vector<16x16xf32>
    %58 = tpu.matmul %55, %56, %cst_35 {dimension_numbers = #tpu.dot_dimension_numbers<[1], [1], [0], [0], [0, 0, 1, 0], [], []>} : vector<16x32xf32>, vector<16x32xf32>, vector<16x16xf32> -> vector<16x16xf32>
    %cst_36 = arith.constant dense<0xFF800000> : vector<16xf32>
    %59 = vector.multi_reduction <maximumf>, %58, %cst_36 [1] : vector<16x16xf32> to vector<16xf32>
    %60 = vector.shape_cast %59 : vector<16xf32> to vector<16x1xf32>
    %61 = vector.broadcast %60 : vector<16x1xf32> to vector<16x16xf32>
    %62 = arith.subf %58, %61 : vector<16x16xf32>
    %63 = math.exp %62 : vector<16x16xf32>
    %cst_37 = arith.constant dense<0.000000e+00> : vector<16xf32>
    %64 = vector.multi_reduction <add>, %63, %cst_37 [1] : vector<16x16xf32> to vector<16xf32>
    %65 = vector.shape_cast %64 : vector<16xf32> to vector<16x1xf32>
    %cst_38 = arith.constant dense<0.000000e+00> : vector<16x32xf32>
    %66 = tpu.matmul %63, %57, %cst_38 {dimension_numbers = #tpu.dot_dimension_numbers<[1], [0], [0], [1], [0, 0, 1, 1], [], []>} : vector<16x16xf32>, vector<16x32xf32>, vector<16x32xf32> -> vector<16x32xf32>
    %cst_39 = arith.constant 1.000000e+00 : f32
    %67 = vector.broadcast %cst_39 : f32 to vector<16x1xf32>
    %68 = arith.divf %67, %65 : vector<16x1xf32>
    %69 = vector.broadcast %68 : vector<16x1xf32> to vector<16x32xf32>
    %70 = arith.mulf %66, %69 : vector<16x32xf32>
    %c0_40 = arith.constant 0 : index
    %c64 = arith.constant 64 : index
    %71 = vector.load %arg13[%c0_40, %c64] : memref<16x128xf32, #tpu.memory_space<vmem>>, vector<16x32xf32>
    tpu.vector_store %arg13[%c0_40, %c64], %70 {strides = array<i32>} : memref<16x128xf32, #tpu.memory_space<vmem>>, vector<16x32xf32>,
    %72 = vector.extract_strided_slice %10 {offsets = [0, 96], sizes = [16, 32], strides = [1, 1]} : vector<16x128xf32> to vector<16x32xf32>
    %73 = vector.extract_strided_slice %15 {offsets = [0, 96], sizes = [16, 32], strides = [1, 1]} : vector<16x128xf32> to vector<16x32xf32>
    %74 = vector.extract_strided_slice %20 {offsets = [0, 96], sizes = [16, 32], strides = [1, 1]} : vector<16x128xf32> to vector<16x32xf32>
    %cst_41 = arith.constant dense<0.000000e+00> : vector<16x16xf32>
    %75 = tpu.matmul %72, %73, %cst_41 {dimension_numbers = #tpu.dot_dimension_numbers<[1], [1], [0], [0], [0, 0, 1, 0], [], []>} : vector<16x32xf32>, vector<16x32xf32>, vector<16x16xf32> -> vector<16x16xf32>
    %cst_42 = arith.constant dense<0xFF800000> : vector<16xf32>
    %76 = vector.multi_reduction <maximumf>, %75, %cst_42 [1] : vector<16x16xf32> to vector<16xf32>
    %77 = vector.shape_cast %76 : vector<16xf32> to vector<16x1xf32>
    %78 = vector.broadcast %77 : vector<16x1xf32> to vector<16x16xf32>
    %79 = arith.subf %75, %78 : vector<16x16xf32>
    %80 = math.exp %79 : vector<16x16xf32>
    %cst_43 = arith.constant dense<0.000000e+00> : vector<16xf32>
    %81 = vector.multi_reduction <add>, %80, %cst_43 [1] : vector<16x16xf32> to vector<16xf32>
    %82 = vector.shape_cast %81 : vector<16xf32> to vector<16x1xf32>
    %cst_44 = arith.constant dense<0.000000e+00> : vector<16x32xf32>
    %83 = tpu.matmul %80, %74, %cst_44 {dimension_numbers = #tpu.dot_dimension_numbers<[1], [0], [0], [1], [0, 0, 1, 1], [], []>} : vector<16x16xf32>, vector<16x32xf32>, vector<16x32xf32> -> vector<16x32xf32>
    %cst_45 = arith.constant 1.000000e+00 : f32
    %84 = vector.broadcast %cst_45 : f32 to vector<16x1xf32>
    %85 = arith.divf %84, %82 : vector<16x1xf32>
    %86 = vector.broadcast %85 : vector<16x1xf32> to vector<16x32xf32>
    %87 = arith.mulf %83, %86 : vector<16x32xf32>
    %c0_46 = arith.constant 0 : index
    %c96 = arith.constant 96 : index
    %88 = vector.load %arg13[%c0_46, %c96] : memref<16x128xf32, #tpu.memory_space<vmem>>, vector<16x32xf32>
    tpu.vector_store %arg13[%c0_46, %c96], %87 {strides = array<i32>} : memref<16x128xf32, #tpu.memory_space<vmem>>, vector<16x32xf32>,
    %c0_47 = arith.constant 0 : index
    %c0_48 = arith.constant 0 : index
    %89 = vector.load %arg13[%c0_47, %c0_48] : memref<16x128xf32, #tpu.memory_space<vmem>>, vector<16x128xf32>
    %c0_49 = arith.constant 0 : index
    %c0_50 = arith.constant 0 : index
    %90 = vector.load %arg10[%c0_49, %c0_50] : memref<128x128xf32, #tpu.memory_space<vmem>>, vector<128x128xf32>
    %cst_51 = arith.constant dense<0.000000e+00> : vector<16x128xf32>
    %91 = tpu.matmul %89, %90, %cst_51 {dimension_numbers = #tpu.dot_dimension_numbers<[1], [0], [0], [1], [0, 0, 1, 1], [], []>} : vector<16x128xf32>, vector<128x128xf32>, vector<16x128xf32> -> vector<16x128xf32>
    %c0_52 = arith.constant 0 : index
    %c0_53 = arith.constant 0 : index
    %92 = vector.load %arg11[%c0_52, %c0_53] : memref<1x128xf32, #tpu.memory_space<vmem>>, vector<1x128xf32>
    %93 = vector.broadcast %92 : vector<1x128xf32> to vector<16x128xf32>
    %94 = arith.addf %91, %93 : vector<16x128xf32>
    %c0_54 = arith.constant 0 : index
    %c0_55 = arith.constant 0 : index
    %c0_56 = arith.constant 0 : index
    %95 = vector.load %arg12[%c0_54, %c0_55, %c0_56] : memref<1x16x128xf32, #tpu.memory_space<vmem>>, vector<1x16x128xf32>
    %96 = vector.shape_cast %95 : vector<1x16x128xf32> to vector<16x128xf32>
    %97 = vector.shape_cast %94 : vector<16x128xf32> to vector<1x16x128xf32>
    tpu.vector_store %arg12[%c0_54, %c0_55, %c0_56], %97 {strides = array<i32>} : memref<1x16x128xf32, #tpu.memory_space<vmem>>, vector<1x16x128xf32>,
    return
  }
  func.func @transform_0(%arg0: i32) -> (i32, i32, i32) {
    %c0_i32 = arith.constant 0 : i32
    %c0_i32_0 = arith.constant 0 : i32
    %c0_i32_1 = arith.constant 0 : i32
    return %arg0, %c0_i32, %c0_i32_0 : i32, i32, i32
  }
  func.func @transform_1(%arg0: i32) -> (i32, i32, i32) {
    %c0_i32 = arith.constant 0 : i32
    %c0_i32_0 = arith.constant 0 : i32
    %c0_i32_1 = arith.constant 0 : i32
    return %arg0, %c0_i32, %c0_i32_0 : i32, i32, i32
  }
  func.func @transform_2(%arg0: i32) -> (i32, i32, i32) {
    %c0_i32 = arith.constant 0 : i32
    %c0_i32_0 = arith.constant 0 : i32
    %c0_i32_1 = arith.constant 0 : i32
    return %arg0, %c0_i32, %c0_i32_0 : i32, i32, i32
  }
  func.func @transform_3(%arg0: i32) -> (i32, i32) {
    %c0_i32 = arith.constant 0 : i32
    %c0_i32_0 = arith.constant 0 : i32
    %c0_i32_1 = arith.constant 0 : i32
    return %c0_i32, %c0_i32_0 : i32, i32
  }
  func.func @transform_4(%arg0: i32) -> (i32, i32) {
    %c0_i32 = arith.constant 0 : i32
    %c0_i32_0 = arith.constant 0 : i32
    %c0_i32_1 = arith.constant 0 : i32
    return %c0_i32, %c0_i32_0 : i32, i32
  }
  func.func @transform_5(%arg0: i32) -> (i32, i32) {
    %c0_i32 = arith.constant 0 : i32
    %c0_i32_0 = arith.constant 0 : i32
    %c0_i32_1 = arith.constant 0 : i32
    return %c0_i32, %c0_i32_0 : i32, i32
  }
  func.func @transform_6(%arg0: i32) -> (i32, i32) {
    %c0_i32 = arith.constant 0 : i32
    %c0_i32_0 = arith.constant 0 : i32
    %c0_i32_1 = arith.constant 0 : i32
    return %c0_i32, %c0_i32_0 : i32, i32
  }
  func.func @transform_7(%arg0: i32) -> (i32, i32) {
    %c0_i32 = arith.constant 0 : i32
    %c0_i32_0 = arith.constant 0 : i32
    %c0_i32_1 = arith.constant 0 : i32
    return %c0_i32, %c0_i32_0 : i32, i32
  }
  func.func @transform_8(%arg0: i32) -> (i32, i32) {
    %c0_i32 = arith.constant 0 : i32
    %c0_i32_0 = arith.constant 0 : i32
    %c0_i32_1 = arith.constant 0 : i32
    return %c0_i32, %c0_i32_0 : i32, i32
  }
  func.func @transform_9(%arg0: i32) -> (i32, i32) {
    %c0_i32 = arith.constant 0 : i32
    %c0_i32_0 = arith.constant 0 : i32
    %c0_i32_1 = arith.constant 0 : i32
    return %c0_i32, %c0_i32_0 : i32, i32
  }
  func.func @transform_10(%arg0: i32) -> (i32, i32) {
    %c0_i32 = arith.constant 0 : i32
    %c0_i32_0 = arith.constant 0 : i32
    %c0_i32_1 = arith.constant 0 : i32
    return %c0_i32, %c0_i32_0 : i32, i32
  }
  func.func @transform_11(%arg0: i32) -> (i32, i32, i32) {
    %c0_i32 = arith.constant 0 : i32
    %c0_i32_0 = arith.constant 0 : i32
    %c0_i32_1 = arith.constant 0 : i32
    return %arg0, %c0_i32, %c0_i32_0 : i32, i32, i32
  }
}

</mosaic_0001>

<llo_original>
// kernel: tpu_custom_call.1
$region0: #{tpu_custom_call.1}
  #allocation0 [shape = 'u32[]', space=smem, size = 0x4, offset = 0x4, fixed_abs, tag = 'smem constant byte address 0x4 - core index']
  #allocation1 [shape = 'u32[72,128]{1,0:T(1,128)}', space=vmem, size = 0x9000, scoped, tag = 'internal scratch']
  #allocation2 [shape = 'f32[16,128]{1,0:T(8,128)}', space=vmem, size = 0x2000, scoped, tag = 'scratch operand']
  %s0 = inlined_call_operand.hbm [shape: f32[2,16,128], index: 0, kind: input, shape index: {}]
  %s1 = inlined_call_operand.hbm [shape: f32[2,16,128], index: 1, kind: input, shape index: {}]
  %s2 = inlined_call_operand.hbm [shape: f32[2,16,128], index: 2, kind: input, shape index: {}]
  %s3 = inlined_call_operand.hbm [shape: f32[128,128], index: 3, kind: input, shape index: {}]
  %s4 = inlined_call_operand.vmem [shape: f32[1,128], index: 4, kind: input, shape index: {}]
  %s5 = inlined_call_operand.hbm [shape: f32[128,128], index: 5, kind: input, shape index: {}]
  %s6 = inlined_call_operand.vmem [shape: f32[1,128], index: 6, kind: input, shape index: {}]
  %s7 = inlined_call_operand.hbm [shape: f32[128,128], index: 7, kind: input, shape index: {}]
  %s8 = inlined_call_operand.vmem [shape: f32[1,128], index: 8, kind: input, shape index: {}]
  %s9 = inlined_call_operand.hbm [shape: f32[128,128], index: 9, kind: input, shape index: {}]
  %s10 = inlined_call_operand.vmem [shape: f32[1,128], index: 10, kind: input, shape index: {}]
  %s11 = inlined_call_operand.hbm [shape: f32[2,16,128], index: 11, kind: output, shape index: {}]
  %s12 = sld [smem:[#allocation0]]
  $region105: #{tpu_custom_call.1} parent=0
    _
  %s14 = ssub.s32 1, %s12
  %s15 = scalar_select 0, %s14, %s12
  $region1: #{tpu_custom_call.1} parent=0
    #allocation3 [shape = 'u8[16384]{0}', space=vmem, size = 0x4000, scoped, tag = 'input window, operand 0']
    #allocation4 [shape = 's32[2]{0}', space=sflag, size = 0x8, scoped, tag = 'scoped memory for tpu_custom_call.1']
    #allocation5 [shape = 's32[2]{0}', space=sflag, size = 0x8, scoped, tag = 'scoped memory for tpu_custom_call.1']
    #allocation6 [shape = 'u8[16384]{0}', space=vmem, size = 0x4000, scoped, tag = 'input window, operand 1']
    #allocation7 [shape = 's32[2]{0}', space=sflag, size = 0x8, scoped, tag = 'scoped memory for tpu_custom_call.1']
    #allocation8 [shape = 'u8[16384]{0}', space=vmem, size = 0x4000, scoped, tag = 'input window, operand 2']
    #allocation9 [shape = 'u8[65536]{0}', space=vmem, size = 0x10000, scoped, tag = 'input window, operand 3, single buffered']
    #allocation10 [shape = 's32[1]{0}', space=sflag, size = 0x4, scoped, tag = 'scoped memory for tpu_custom_call.1']
    #allocation11 [shape = 'u8[65536]{0}', space=vmem, size = 0x10000, scoped, tag = 'input window, operand 5, single buffered']
    #allocation12 [shape = 'u8[65536]{0}', space=vmem, size = 0x10000, scoped, tag = 'input window, operand 7, single buffered']
    #allocation13 [shape = 's32[1]{0}', space=sflag, size = 0x4, scoped, tag = 'scoped memory for tpu_custom_call.1']
    #allocation14 [shape = 'u8[65536]{0}', space=vmem, size = 0x10000, scoped, tag = 'input window, operand 9, single buffered']
    #allocation15 [shape = 'u8[16384]{0}', space=vmem, size = 0x4000, scoped, tag = 'output window, operand 0']
    %16 = vsyncpa [#allocation4], 0
    %s17 = scalar_lea.sflag [#allocation4], 1
    %18 = vsyncpa %s17, 0
    %19 = vsyncpa [#allocation7], 0
    %s20 = scalar_lea.sflag [#allocation7], 1
    %21 = vsyncpa %s20, 0
    %22 = vsyncpa [#allocation10], 0
    %23 = vsyncpa [#allocation13], 0
    %24 = vsyncpa [#allocation5], 0
    %s25 = scalar_lea.sflag [#allocation5], 1
    %26 = vsyncpa %s25, 0
    loop: start=0, step=1, limit=4
    $region2: #{tpu_custom_call.1} parent=1 // loop_pre_header
      _
    $region3: #{tpu_custom_call.1} parent=1 // loop_header
      %s28 = sphi 0, %s32
      %p29 = scmp.ge.s32.totalorder %s28, 4
      %s38 = sphi 0, %s40
      %s41 = sphi 0, %s38
      %s42 = sphi 0, %s41
      %s58 = sphi 0, %s42
      %s64 = sphi 0, %s66
      %s67 = sphi 0, %s64
      %s68 = sphi 0, %s67
      %s84 = sphi 0, %s68
      %s90 = sphi 0, %s92
      %s93 = sphi 0, %s90
      %s94 = sphi 0, %s93
      %s110 = sphi 0, %s94
      %s114 = sphi 0, %s114
      %s116 = sphi 0, %s114
      %s117 = sphi 0, %s116
      %s131 = sphi 0, %s117
      %s135 = sphi 0, %s135
      %s137 = sphi 0, %s135
      %s138 = sphi 0, %s137
      %s152 = sphi 0, %s138
      %s156 = sphi 0, %s156
      %s158 = sphi 0, %s156
      %s159 = sphi 0, %s158
      %s173 = sphi 0, %s159
      %s177 = sphi 0, %s177
      %s179 = sphi 0, %s177
      %s180 = sphi 0, %s179
      %s194 = sphi 0, %s180
      %s198 = sphi 0, %s198
      %s200 = sphi 0, %s198
      %s201 = sphi 0, %s200
      %s215 = sphi 0, %s201
      %s219 = sphi 0, %s219
      %s221 = sphi 0, %s219
      %s222 = sphi 0, %s221
      %s236 = sphi 0, %s222
      %s240 = sphi 0, %s240
      %s242 = sphi 0, %s240
      %s243 = sphi 0, %s242
      %s257 = sphi 0, %s243
      %s261 = sphi 0, %s261
      %s263 = sphi 0, %s261
      %s264 = sphi 0, %s263
      %s278 = sphi 0, %s264
      %s284 = sphi 0, %s286
      %s287 = sphi 0, %s284
      %s288 = sphi 0, %s287
      %s304 = sphi 0, %s288
    $region4: #{tpu_custom_call.1} parent=1 // loop_header_branch
      %31 = sbr.rel (%p29) target = $region8
    $region5: #{tpu_custom_call.1} parent=1 // loop_body
      %s33 = ssub.s32 %s28, 1
      %s34 = ssub.s32 %s28, 2
      %s35 = sadd.s32 %s28, 1
      %s36 = ssub.s32 %s28, %s35
      %p37 = scmp.eq.s32.totalorder %s36, 0
      %s39 = sadd.s32 %s38, 1
      %s40 = scalar_select %p37, %s38, %s39
      %p43 = pneg %p37
      %p44 = scmp.eq.s32.totalorder %s28, 1
      %p45 = por %p43, %p44
      %p46 = scmp.ne.s32.totalorder %s38, %s41
      %p47 = scmp.eq.s32.totalorder %s28, 0
      %p48 = por %p46, %p47
      %p49 = scmp.ne.s32.totalorder %s38, %s41
      %p50 = scmp.eq.s32.totalorder %s33, 1
      %p51 = por %p49, %p50
      %p52 = scmp.ne.s32.totalorder %s41, %s42
      %p53 = scmp.eq.s32.totalorder %s33, 0
      %p54 = por %p52, %p53
      %p55 = scmp.ne.s32.totalorder %s41, %s42
      %p56 = scmp.eq.s32.totalorder %s34, 1
      %p57 = por %p55, %p56
      %p59 = scmp.ne.s32.totalorder %s42, %s58
      %p60 = scmp.eq.s32.totalorder %s34, 0
      %p61 = por %p59, %p60
      %s62 = ssub.s32 %s28, %s35
      %p63 = scmp.eq.s32.totalorder %s62, 0
      %s65 = sadd.s32 %s64, 1
      %s66 = scalar_select %p63, %s64, %s65
      %p69 = pneg %p63
      %p70 = scmp.eq.s32.totalorder %s28, 1
      %p71 = por %p69, %p70
      %p72 = scmp.ne.s32.totalorder %s64, %s67
      %p73 = scmp.eq.s32.totalorder %s28, 0
      %p74 = por %p72, %p73
      %p75 = scmp.ne.s32.totalorder %s64, %s67
      %p76 = scmp.eq.s32.totalorder %s33, 1
      %p77 = por %p75, %p76
      %p78 = scmp.ne.s32.totalorder %s67, %s68
      %p79 = scmp.eq.s32.totalorder %s33, 0
      %p80 = por %p78, %p79
      %p81 = scmp.ne.s32.totalorder %s67, %s68
      %p82 = scmp.eq.s32.totalorder %s34, 1
      %p83 = por %p81, %p82
      %p85 = scmp.ne.s32.totalorder %s68, %s84
      %p86 = scmp.eq.s32.totalorder %s34, 0
      %p87 = por %p85, %p86
      %s88 = ssub.s32 %s28, %s35
      %p89 = scmp.eq.s32.totalorder %s88, 0
      %s91 = sadd.s32 %s90, 1
      %s92 = scalar_select %p89, %s90, %s91
      %p95 = pneg %p89
      %p96 = scmp.eq.s32.totalorder %s28, 1
      %p97 = por %p95, %p96
      %p98 = scmp.ne.s32.totalorder %s90, %s93
      %p99 = scmp.eq.s32.totalorder %s28, 0
      %p100 = por %p98, %p99
      %p101 = scmp.ne.s32.totalorder %s90, %s93
      %p102 = scmp.eq.s32.totalorder %s33, 1
      %p103 = por %p101, %p102
      %p104 = scmp.ne.s32.totalorder %s93, %s94
      %p105 = scmp.eq.s32.totalorder %s33, 0
      %p106 = por %p104, %p105
      %p107 = scmp.ne.s32.totalorder %s93, %s94
      %p108 = scmp.eq.s32.totalorder %s34, 1
      %p109 = por %p107, %p108
      %p111 = scmp.ne.s32.totalorder %s94, %s110
      %p112 = scmp.eq.s32.totalorder %s34, 0
      %p113 = por %p111, %p112
      %s115 = sadd.s32 %s114, 1
      %p118 = scmp.eq.s32.totalorder %s28, 1
      %p119 = scmp.ne.s32.totalorder %s114, %s116
      %p120 = scmp.eq.s32.totalorder %s28, 0
      %p121 = por %p119, %p120
      %p122 = scmp.ne.s32.totalorder %s114, %s116
      %p123 = scmp.eq.s32.totalorder %s33, 1
      %p124 = por %p122, %p123
      %p125 = scmp.ne.s32.totalorder %s116, %s117
      %p126 = scmp.eq.s32.totalorder %s33, 0
      %p127 = por %p125, %p126
      %p128 = scmp.ne.s32.totalorder %s116, %s117
      %p129 = scmp.eq.s32.totalorder %s34, 1
      %p130 = por %p128, %p129
      %p132 = scmp.ne.s32.totalorder %s117, %s131
      %p133 = scmp.eq.s32.totalorder %s34, 0
      %p134 = por %p132, %p133
      %s136 = sadd.s32 %s135, 1
      %p139 = scmp.eq.s32.totalorder %s28, 1
      %p140 = scmp.ne.s32.totalorder %s135, %s137
      %p141 = scmp.eq.s32.totalorder %s28, 0
      %p142 = por %p140, %p141
      %p143 = scmp.ne.s32.totalorder %s135, %s137
      %p144 = scmp.eq.s32.totalorder %s33, 1
      %p145 = por %p143, %p144
      %p146 = scmp.ne.s32.totalorder %s137, %s138
      %p147 = scmp.eq.s32.totalorder %s33, 0
      %p148 = por %p146, %p147
      %p149 = scmp.ne.s32.totalorder %s137, %s138
      %p150 = scmp.eq.s32.totalorder %s34, 1
      %p151 = por %p149, %p150
      %p153 = scmp.ne.s32.totalorder %s138, %s152
      %p154 = scmp.eq.s32.totalorder %s34, 0
      %p155 = por %p153, %p154
      %s157 = sadd.s32 %s156, 1
      %p160 = scmp.eq.s32.totalorder %s28, 1
      %p161 = scmp.ne.s32.totalorder %s156, %s158
      %p162 = scmp.eq.s32.totalorder %s28, 0
      %p163 = por %p161, %p162
      %p164 = scmp.ne.s32.totalorder %s156, %s158
      %p165 = scmp.eq.s32.totalorder %s33, 1
      %p166 = por %p164, %p165
      %p167 = scmp.ne.s32.totalorder %s158, %s159
      %p168 = scmp.eq.s32.totalorder %s33, 0
      %p169 = por %p167, %p168
      %p170 = scmp.ne.s32.totalorder %s158, %s159
      %p171 = scmp.eq.s32.totalorder %s34, 1
      %p172 = por %p170, %p171
      %p174 = scmp.ne.s32.totalorder %s159, %s173
      %p175 = scmp.eq.s32.totalorder %s34, 0
      %p176 = por %p174, %p175
      %s178 = sadd.s32 %s177, 1
      %p181 = scmp.eq.s32.totalorder %s28, 1
      %p182 = scmp.ne.s32.totalorder %s177, %s179
      %p183 = scmp.eq.s32.totalorder %s28, 0
      %p184 = por %p182, %p183
      %p185 = scmp.ne.s32.totalorder %s177, %s179
      %p186 = scmp.eq.s32.totalorder %s33, 1
      %p187 = por %p185, %p186
      %p188 = scmp.ne.s32.totalorder %s179, %s180
      %p189 = scmp.eq.s32.totalorder %s33, 0
      %p190 = por %p188, %p189
      %p191 = scmp.ne.s32.totalorder %s179, %s180
      %p192 = scmp.eq.s32.totalorder %s34, 1
      %p193 = por %p191, %p192
      %p195 = scmp.ne.s32.totalorder %s180, %s194
      %p196 = scmp.eq.s32.totalorder %s34, 0
      %p197 = por %p195, %p196
      %s199 = sadd.s32 %s198, 1
      %p202 = scmp.eq.s32.totalorder %s28, 1
      %p203 = scmp.ne.s32.totalorder %s198, %s200
      %p204 = scmp.eq.s32.totalorder %s28, 0
      %p205 = por %p203, %p204
      %p206 = scmp.ne.s32.totalorder %s198, %s200
      %p207 = scmp.eq.s32.totalorder %s33, 1
      %p208 = por %p206, %p207
      %p209 = scmp.ne.s32.totalorder %s200, %s201
      %p210 = scmp.eq.s32.totalorder %s33, 0
      %p211 = por %p209, %p210
      %p212 = scmp.ne.s32.totalorder %s200, %s201
      %p213 = scmp.eq.s32.totalorder %s34, 1
      %p214 = por %p212, %p213
      %p216 = scmp.ne.s32.totalorder %s201, %s215
      %p217 = scmp.eq.s32.totalorder %s34, 0
      %p218 = por %p216, %p217
      %s220 = sadd.s32 %s219, 1
      %p223 = scmp.eq.s32.totalorder %s28, 1
      %p224 = scmp.ne.s32.totalorder %s219, %s221
      %p225 = scmp.eq.s32.totalorder %s28, 0
      %p226 = por %p224, %p225
      %p227 = scmp.ne.s32.totalorder %s219, %s221
      %p228 = scmp.eq.s32.totalorder %s33, 1
      %p229 = por %p227, %p228
      %p230 = scmp.ne.s32.totalorder %s221, %s222
      %p231 = scmp.eq.s32.totalorder %s33, 0
      %p232 = por %p230, %p231
      %p233 = scmp.ne.s32.totalorder %s221, %s222
      %p234 = scmp.eq.s32.totalorder %s34, 1
      %p235 = por %p233, %p234
      %p237 = scmp.ne.s32.totalorder %s222, %s236
      %p238 = scmp.eq.s32.totalorder %s34, 0
      %p239 = por %p237, %p238
      %s241 = sadd.s32 %s240, 1
      %p244 = scmp.eq.s32.totalorder %s28, 1
      %p245 = scmp.ne.s32.totalorder %s240, %s242
      %p246 = scmp.eq.s32.totalorder %s28, 0
      %p247 = por %p245, %p246
      %p248 = scmp.ne.s32.totalorder %s240, %s242
      %p249 = scmp.eq.s32.totalorder %s33, 1
      %p250 = por %p248, %p249
      %p251 = scmp.ne.s32.totalorder %s242, %s243
      %p252 = scmp.eq.s32.totalorder %s33, 0
      %p253 = por %p251, %p252
      %p254 = scmp.ne.s32.totalorder %s242, %s243
      %p255 = scmp.eq.s32.totalorder %s34, 1
      %p256 = por %p254, %p255
      %p258 = scmp.ne.s32.totalorder %s243, %s257
      %p259 = scmp.eq.s32.totalorder %s34, 0
      %p260 = por %p258, %p259
      %s262 = sadd.s32 %s261, 1
      %p265 = scmp.eq.s32.totalorder %s28, 1
      %p266 = scmp.ne.s32.totalorder %s261, %s263
      %p267 = scmp.eq.s32.totalorder %s28, 0
      %p268 = por %p266, %p267
      %p269 = scmp.ne.s32.totalorder %s261, %s263
      %p270 = scmp.eq.s32.totalorder %s33, 1
      %p271 = por %p269, %p270
      %p272 = scmp.ne.s32.totalorder %s263, %s264
      %p273 = scmp.eq.s32.totalorder %s33, 0
      %p274 = por %p272, %p273
      %p275 = scmp.ne.s32.totalorder %s263, %s264
      %p276 = scmp.eq.s32.totalorder %s34, 1
      %p277 = por %p275, %p276
      %p279 = scmp.ne.s32.totalorder %s264, %s278
      %p280 = scmp.eq.s32.totalorder %s34, 0
      %p281 = por %p279, %p280
      %s282 = ssub.s32 %s28, %s35
      %p283 = scmp.eq.s32.totalorder %s282, 0
      %s285 = sadd.s32 %s284, 1
      %s286 = scalar_select %p283, %s284, %s285
      %p289 = pneg %p283
      %p290 = scmp.eq.s32.totalorder %s28, 1
      %p291 = por %p289, %p290
      %p292 = scmp.ne.s32.totalorder %s284, %s287
      %p293 = scmp.eq.s32.totalorder %s28, 0
      %p294 = por %p292, %p293
      %p295 = scmp.ne.s32.totalorder %s284, %s287
      %p296 = scmp.eq.s32.totalorder %s33, 1
      %p297 = por %p295, %p296
      %p298 = scmp.ne.s32.totalorder %s287, %s288
      %p299 = scmp.eq.s32.totalorder %s33, 0
      %p300 = por %p298, %p299
      %p301 = scmp.ne.s32.totalorder %s287, %s288
      %p302 = scmp.eq.s32.totalorder %s34, 1
      %p303 = por %p301, %p302
      %p305 = scmp.ne.s32.totalorder %s288, %s304
      %p306 = scmp.eq.s32.totalorder %s34, 0
      %p307 = por %p305, %p306
      %p308 = scmp.le.s32.totalorder 1, %s28
      %p309 = scmp.lt.s32.totalorder %s28, 3
      %p310 = pnand %p308, %p309
      %p311 = pneg %p310
      // Predicated region
      $region9: #{tpu_custom_call.1} parent=5 // pred_check
        _
      $region10: #{tpu_custom_call.1} parent=5 // pred_check_branch
        %313 = sbr.rel (%p310) target = $region12
      $region11: #{tpu_custom_call.1} parent=5 // pred_region
        %s314 = ssub.s32 %s28, 1
        // Predicated region
        $region13: #{tpu_custom_call.1} parent=11 // pred_check
          %p315 = pneg %p127
        $region14: #{tpu_custom_call.1} parent=11 // pred_check_branch
          %317 = sbr.rel (%p315) target = $region16
        $region15: #{tpu_custom_call.1} parent=11 // pred_region
          %319 = vsyncadd [#allocation10], 0
          %s320 = sshll.u32 %s3, 4
          %s321 = int_to_ptr.hbm [resolvable:$true] %s320
          %s322 = sshll.u32 [#allocation9], 4
          %s323 = int_to_ptr.vmem [resolvable:$true] %s322
          %328 = dma.hbm_to_vmem [thread:$0]  %s321, 2048, %s323, [#allocation10], 128, 128, 8
        $region16: #{tpu_custom_call.1} parent=11 // pred_fallthru
          _
        // Predicated region
        $region17: #{tpu_custom_call.1} parent=11 // pred_check
          %p329 = pneg %p148
        $region18: #{tpu_custom_call.1} parent=11 // pred_check_branch
          %331 = sbr.rel (%p329) target = $region20
        $region19: #{tpu_custom_call.1} parent=11 // pred_region
          _
        $region20: #{tpu_custom_call.1} parent=11 // pred_fallthru
          _
        // Predicated region
        $region21: #{tpu_custom_call.1} parent=11 // pred_check
          %p332 = pneg %p169
        $region22: #{tpu_custom_call.1} parent=11 // pred_check_branch
          %334 = sbr.rel (%p332) target = $region24
        $region23: #{tpu_custom_call.1} parent=11 // pred_region
          %336 = vsyncadd [#allocation10], 0
          %s337 = sshll.u32 %s5, 4
          %s338 = int_to_ptr.hbm [resolvable:$true] %s337
          %s339 = sshll.u32 [#allocation11], 4
          %s340 = int_to_ptr.vmem [resolvable:$true] %s339
          %345 = dma.hbm_to_vmem [thread:$0]  %s338, 2048, %s340, [#allocation10], 128, 128, 8
        $region24: #{tpu_custom_call.1} parent=11 // pred_fallthru
          _
        // Predicated region
        $region25: #{tpu_custom_call.1} parent=11 // pred_check
          %p346 = pneg %p190
        $region26: #{tpu_custom_call.1} parent=11 // pred_check_branch
          %348 = sbr.rel (%p346) target = $region28
        $region27: #{tpu_custom_call.1} parent=11 // pred_region
          _
        $region28: #{tpu_custom_call.1} parent=11 // pred_fallthru
          _
        // Predicated region
        $region29: #{tpu_custom_call.1} parent=11 // pred_check
          %p349 = pneg %p211
        $region30: #{tpu_custom_call.1} parent=11 // pred_check_branch
          %351 = sbr.rel (%p349) target = $region32
        $region31: #{tpu_custom_call.1} parent=11 // pred_region
          %353 = vsyncadd [#allocation13], 0
          %s354 = sshll.u32 %s7, 4
          %s355 = int_to_ptr.hbm [resolvable:$true] %s354
          %s356 = sshll.u32 [#allocation12], 4
          %s357 = int_to_ptr.vmem [resolvable:$true] %s356
          %362 = dma.hbm_to_vmem [thread:$0]  %s355, 2048, %s357, [#allocation13], 128, 128, 8
        $region32: #{tpu_custom_call.1} parent=11 // pred_fallthru
          _
        // Predicated region
        $region33: #{tpu_custom_call.1} parent=11 // pred_check
          %p363 = pneg %p232
        $region34: #{tpu_custom_call.1} parent=11 // pred_check_branch
          %365 = sbr.rel (%p363) target = $region36
        $region35: #{tpu_custom_call.1} parent=11 // pred_region
          _
        $region36: #{tpu_custom_call.1} parent=11 // pred_fallthru
          _
        // Predicated region
        $region37: #{tpu_custom_call.1} parent=11 // pred_check
          %p366 = pneg %p253
        $region38: #{tpu_custom_call.1} parent=11 // pred_check_branch
          %368 = sbr.rel (%p366) target = $region40
        $region39: #{tpu_custom_call.1} parent=11 // pred_region
          %370 = vsyncadd [#allocation13], 0
          %s371 = sshll.u32 %s9, 4
          %s372 = int_to_ptr.hbm [resolvable:$true] %s371
          %s373 = sshll.u32 [#allocation14], 4
          %s374 = int_to_ptr.vmem [resolvable:$true] %s373
          %379 = dma.hbm_to_vmem [thread:$0]  %s372, 2048, %s374, [#allocation13], 128, 128, 8
        $region40: #{tpu_custom_call.1} parent=11 // pred_fallthru
          _
        // Predicated region
        $region41: #{tpu_custom_call.1} parent=11 // pred_check
          %p380 = pneg %p274
        $region42: #{tpu_custom_call.1} parent=11 // pred_check_branch
          %382 = sbr.rel (%p380) target = $region44
        $region43: #{tpu_custom_call.1} parent=11 // pred_region
          _
        $region44: #{tpu_custom_call.1} parent=11 // pred_fallthru
          _
      $region12: #{tpu_custom_call.1} parent=5 // pred_fallthru
        _
      %p383 = scmp.lt.s32.totalorder %s28, 2
      // Predicated region
      $region45: #{tpu_custom_call.1} parent=5 // pred_check
        %p384 = pneg %p383
      $region46: #{tpu_custom_call.1} parent=5 // pred_check_branch
        %386 = sbr.rel (%p384) target = $region48
      $region47: #{tpu_custom_call.1} parent=5 // pred_region
        // Predicated region
        $region49: #{tpu_custom_call.1} parent=47 // pred_check
          %p387 = pneg %p48
        $region50: #{tpu_custom_call.1} parent=47 // pred_check_branch
          %389 = sbr.rel (%p387) target = $region52
        $region51: #{tpu_custom_call.1} parent=47 // pred_region
          %s390 = sand.u32 %s38, 1
          %s391 = scalar_lea.sflag [#allocation4], %s390
          %s392 = sand.u32 %s38, 1
          %s393 = smul.addr %s392, 16
          %s394 = scalar_lea.vmem [#allocation3], %s393
          %396 = vsyncadd %s391, 0
          %s397 = smul.addr %s28, 2
          %s398 = smul.addr %s397, 8
          %s399 = scalar_lea.hbm %s0, %s398
          %s400 = sshll.u32 %s399, 4
          %s401 = int_to_ptr.hbm [resolvable:$true] %s400
          %s402 = sshll.u32 %s394, 4
          %s403 = int_to_ptr.vmem [resolvable:$true] %s402
          %408 = dma.hbm_to_vmem [thread:$0]  %s401, 256, %s403, %s391, 128, 128, 8
        $region52: #{tpu_custom_call.1} parent=47 // pred_fallthru
          _
        // Predicated region
        $region53: #{tpu_custom_call.1} parent=47 // pred_check
          %p409 = pneg %p74
        $region54: #{tpu_custom_call.1} parent=47 // pred_check_branch
          %411 = sbr.rel (%p409) target = $region56
        $region55: #{tpu_custom_call.1} parent=47 // pred_region
          %s412 = sand.u32 %s28, 1
          %s413 = scalar_lea.sflag [#allocation7], %s412
          %s414 = sand.u32 %s64, 1
          %s415 = smul.addr %s414, 16
          %s416 = scalar_lea.vmem [#allocation6], %s415
          %418 = vsyncadd %s413, 0
          %s419 = smul.addr %s28, 2
          %s420 = smul.addr %s419, 8
          %s421 = scalar_lea.hbm %s1, %s420
          %s422 = sshll.u32 %s421, 4
          %s423 = int_to_ptr.hbm [resolvable:$true] %s422
          %s424 = sshll.u32 %s416, 4
          %s425 = int_to_ptr.vmem [resolvable:$true] %s424
          %430 = dma.hbm_to_vmem [thread:$0]  %s423, 256, %s425, %s413, 128, 128, 8
        $region56: #{tpu_custom_call.1} parent=47 // pred_fallthru
          _
        // Predicated region
        $region57: #{tpu_custom_call.1} parent=47 // pred_check
          %p431 = pneg %p100
        $region58: #{tpu_custom_call.1} parent=47 // pred_check_branch
          %433 = sbr.rel (%p431) target = $region60
        $region59: #{tpu_custom_call.1} parent=47 // pred_region
          %s434 = sand.u32 %s28, 1
          %s435 = scalar_lea.sflag [#allocation7], %s434
          %s436 = sand.u32 %s90, 1
          %s437 = smul.addr %s436, 16
          %s438 = scalar_lea.vmem [#allocation8], %s437
          %440 = vsyncadd %s435, 0
          %s441 = smul.addr %s28, 2
          %s442 = smul.addr %s441, 8
          %s443 = scalar_lea.hbm %s2, %s442
          %s444 = sshll.u32 %s443, 4
          %s445 = int_to_ptr.hbm [resolvable:$true] %s444
          %s446 = sshll.u32 %s438, 4
          %s447 = int_to_ptr.vmem [resolvable:$true] %s446
          %452 = dma.hbm_to_vmem [thread:$0]  %s445, 256, %s447, %s435, 128, 128, 8
        $region60: #{tpu_custom_call.1} parent=47 // pred_fallthru
          _
      $region48: #{tpu_custom_call.1} parent=5 // pred_fallthru
        _
      %p453 = scmp.le.s32.totalorder 1, %s28
      %p454 = scmp.lt.s32.totalorder %s28, 3
      %p455 = pnand %p453, %p454
      %p456 = pneg %p455
      // Predicated region
      $region61: #{tpu_custom_call.1} parent=5 // pred_check
        _
      $region62: #{tpu_custom_call.1} parent=5 // pred_check_branch
        %458 = sbr.rel (%p455) target = $region64
      $region63: #{tpu_custom_call.1} parent=5 // pred_region
        %s459 = ssub.s32 %s28, 1
        %s460 = sand.u32 %s41, 1
        %s461 = scalar_lea.sflag [#allocation4], %s460
        %s462 = sand.u32 %s41, 1
        %s463 = smul.addr %s462, 16
        %s464 = scalar_lea.vmem [#allocation3], %s463
        // Predicated region
        $region65: #{tpu_custom_call.1} parent=63 // pred_check
          %p465 = pneg %p54
        $region66: #{tpu_custom_call.1} parent=63 // pred_check_branch
          %467 = sbr.rel (%p465) target = $region68
        $region67: #{tpu_custom_call.1} parent=63 // pred_region
          %469 = dma.done %s461, 256
        $region68: #{tpu_custom_call.1} parent=63 // pred_fallthru
          _
        %s470 = sand.u32 %s33, 1
        %s471 = scalar_lea.sflag [#allocation7], %s470
        %s472 = sand.u32 %s67, 1
        %s473 = smul.addr %s472, 16
        %s474 = scalar_lea.vmem [#allocation6], %s473
        // Predicated region
        $region69: #{tpu_custom_call.1} parent=63 // pred_check
          %p475 = pneg %p80
        $region70: #{tpu_custom_call.1} parent=63 // pred_check_branch
          %477 = sbr.rel (%p475) target = $region72
        $region71: #{tpu_custom_call.1} parent=63 // pred_region
          %479 = dma.done %s471, 256
        $region72: #{tpu_custom_call.1} parent=63 // pred_fallthru
          _
        %s480 = sand.u32 %s33, 1
        %s481 = scalar_lea.sflag [#allocation7], %s480
        %s482 = sand.u32 %s93, 1
        %s483 = smul.addr %s482, 16
        %s484 = scalar_lea.vmem [#allocation8], %s483
        // Predicated region
        $region73: #{tpu_custom_call.1} parent=63 // pred_check
          %p485 = pneg %p106
        $region74: #{tpu_custom_call.1} parent=63 // pred_check_branch
          %487 = sbr.rel (%p485) target = $region76
        $region75: #{tpu_custom_call.1} parent=63 // pred_region
          %489 = dma.done %s481, 256
        $region76: #{tpu_custom_call.1} parent=63 // pred_fallthru
          _
        // Predicated region
        $region77: #{tpu_custom_call.1} parent=63 // pred_check
          %p490 = pneg %p127
        $region78: #{tpu_custom_call.1} parent=63 // pred_check_branch
          %492 = sbr.rel (%p490) target = $region80
        $region79: #{tpu_custom_call.1} parent=63 // pred_region
          %494 = dma.done [#allocation10], 2048
        $region80: #{tpu_custom_call.1} parent=63 // pred_fallthru
          _
        // Predicated region
        $region81: #{tpu_custom_call.1} parent=63 // pred_check
          %p495 = pneg %p169
        $region82: #{tpu_custom_call.1} parent=63 // pred_check_branch
          %497 = sbr.rel (%p495) target = $region84
        $region83: #{tpu_custom_call.1} parent=63 // pred_region
          %499 = dma.done [#allocation10], 2048
        $region84: #{tpu_custom_call.1} parent=63 // pred_fallthru
          _
        // Predicated region
        $region85: #{tpu_custom_call.1} parent=63 // pred_check
          %p500 = pneg %p211
        $region86: #{tpu_custom_call.1} parent=63 // pred_check_branch
          %502 = sbr.rel (%p500) target = $region88
        $region87: #{tpu_custom_call.1} parent=63 // pred_region
          %504 = dma.done [#allocation13], 2048
        $region88: #{tpu_custom_call.1} parent=63 // pred_fallthru
          _
        // Predicated region
        $region89: #{tpu_custom_call.1} parent=63 // pred_check
          %p505 = pneg %p253
        $region90: #{tpu_custom_call.1} parent=63 // pred_check_branch
          %507 = sbr.rel (%p505) target = $region92
        $region91: #{tpu_custom_call.1} parent=63 // pred_region
          %509 = dma.done [#allocation13], 2048
        $region92: #{tpu_custom_call.1} parent=63 // pred_fallthru
          _
        %s510 = sand.u32 %s41, 1
        %s511 = scalar_lea.sflag [#allocation4], %s510
        %s512 = sand.u32 %s41, 1
        %s513 = smul.addr %s512, 16
        %s514 = scalar_lea.vmem [#allocation3], %s513
        %p515 = pneg %p54
        %p516 = pneg %p51
        %s517 = sand.u32 %s33, 1
        %s518 = scalar_lea.sflag [#allocation7], %s517
        %s519 = sand.u32 %s67, 1
        %s520 = smul.addr %s519, 16
        %s521 = scalar_lea.vmem [#allocation6], %s520
        %p522 = pneg %p80
        %p523 = pneg %p77
        %s524 = sand.u32 %s33, 1
        %s525 = scalar_lea.sflag [#allocation7], %s524
        %s526 = sand.u32 %s93, 1
        %s527 = smul.addr %s526, 16
        %s528 = scalar_lea.vmem [#allocation8], %s527
        %p529 = pneg %p106
        %p530 = pneg %p103
        %p531 = pneg %p127
        %p532 = pneg %p124
        %p533 = pneg %p148
        %p534 = pneg %p145
        %p535 = pneg %p169
        %p536 = pneg %p166
        %p537 = pneg %p190
        %p538 = pneg %p187
        %p539 = pneg %p211
        %p540 = pneg %p208
        %p541 = pneg %p232
        %p542 = pneg %p229
        %p543 = pneg %p253
        %p544 = pneg %p250
        %p545 = pneg %p274
        %p546 = pneg %p271
        %p547 = pneg %p300
        %p548 = pneg %p297
        %s549 = sand.u32 %s287, 1
        %s550 = scalar_lea.sflag [#allocation5], %s549
        %s551 = sand.u32 %s287, 1
        %s552 = smul.addr %s551, 16
        %s553 = scalar_lea.vmem [#allocation15], %s552
        %v554 = vld [vmem:[%s464] sm:$0xff]
        %v555 = vld [vmem:[%s464 + $0x8] sm:$0xff]
        %v556 = vld [vmem:[%s474] sm:$0xff]
        %v557 = vld [vmem:[%s474 + $0x8] sm:$0xff]
        %v558 = vld [vmem:[%s484] sm:$0xff]
        %v559 = vld [vmem:[%s484 + $0x8] sm:$0xff]
        %v560 = vld [vmem:[#allocation9] sm:$0xff]
        %v561 = vld [vmem:[#allocation9 + $0x8] sm:$0xff]
        %v562 = vld [vmem:[#allocation9 + $0x10] sm:$0xff]
        %v563 = vld [vmem:[#allocation9 + $0x18] sm:$0xff]
        %v564 = vld [vmem:[#allocation9 + $0x20] sm:$0xff]
        %v565 = vld [vmem:[#allocation9 + $0x28] sm:$0xff]
        %v566 = vld [vmem:[#allocation9 + $0x30] sm:$0xff]
        %v567 = vld [vmem:[#allocation9 + $0x38] sm:$0xff]
        %v568 = vld [vmem:[#allocation9 + $0x40] sm:$0xff]
        %v569 = vld [vmem:[#allocation9 + $0x48] sm:$0xff]
        %v570 = vld [vmem:[#allocation9 + $0x50] sm:$0xff]
        %v571 = vld [vmem:[#allocation9 + $0x58] sm:$0xff]
        %v572 = vld [vmem:[#allocation9 + $0x60] sm:$0xff]
        %v573 = vld [vmem:[#allocation9 + $0x68] sm:$0xff]
        %v574 = vld [vmem:[#allocation9 + $0x70] sm:$0xff]
        %v575 = vld [vmem:[#allocation9 + $0x78] sm:$0xff]
        %v576 = vld [vmem:[%s4] sm:$0x1]
        %v578 = vperm.slane %v576, 0
        %580 = vmatpush.msra.mxu0 %v575
        %581 = vmatpush.msra.mxu0 %v574
        %582 = vmatpush.msra.mxu0 %v573
        %583 = vmatpush.msra.mxu0 %v572
        %584 = vmatpush.msra.mxu0 %v571
        %585 = vmatpush.msra.mxu0 %v570
        %586 = vmatpush.msra.mxu0 %v569
        %587 = vmatpush.msra.mxu0 %v568
        %588 = vmatpush.msra.mxu0 %v567
        %589 = vmatpush.msra.mxu0 %v566
        %590 = vmatpush.msra.mxu0 %v565
        %591 = vmatpush.msra.mxu0 %v564
        %592 = vmatpush.msra.mxu0 %v563
        %593 = vmatpush.msra.mxu0 %v562
        %594 = vmatpush.msra.mxu0 %v561
        %595 = vmatpush.msra.mxu0 %v560
        %596 = vmatmul.f32.gmra.mxu0 %v554
        %v597 = vpop.f32.mrf.mxu0
        %v598 = vadd.f32 %v578, %v597
        %599 = vmatmul.f32.gmra.mxu0 %v555
        %v600 = vpop.f32.mrf.mxu0
        %v601 = vadd.f32 %v578, %v600
        %602 = vdwg.mxu0
        %v603 = vld [vmem:[#allocation11] sm:$0xff]
        %v604 = vld [vmem:[#allocation11 + $0x8] sm:$0xff]
        %v605 = vld [vmem:[#allocation11 + $0x10] sm:$0xff]
        %v606 = vld [vmem:[#allocation11 + $0x18] sm:$0xff]
        %v607 = vld [vmem:[#allocation11 + $0x20] sm:$0xff]
        %v608 = vld [vmem:[#allocation11 + $0x28] sm:$0xff]
        %v609 = vld [vmem:[#allocation11 + $0x30] sm:$0xff]
        %v610 = vld [vmem:[#allocation11 + $0x38] sm:$0xff]
        %v611 = vld [vmem:[#allocation11 + $0x40] sm:$0xff]
        %v612 = vld [vmem:[#allocation11 + $0x48] sm:$0xff]
        %v613 = vld [vmem:[#allocation11 + $0x50] sm:$0xff]
        %v614 = vld [vmem:[#allocation11 + $0x58] sm:$0xff]
        %v615 = vld [vmem:[#allocation11 + $0x60] sm:$0xff]
        %v616 = vld [vmem:[#allocation11 + $0x68] sm:$0xff]
        %v617 = vld [vmem:[#allocation11 + $0x70] sm:$0xff]
        %v618 = vld [vmem:[#allocation11 + $0x78] sm:$0xff]
        %v619 = vld [vmem:[%s6] sm:$0x1]
        %v621 = vperm.slane %v619, 0
        %623 = vmatpush.msra.mxu0 %v618
        %624 = vmatpush.msra.mxu0 %v617
        %625 = vmatpush.msra.mxu0 %v616
        %626 = vmatpush.msra.mxu0 %v615
        %627 = vmatpush.msra.mxu0 %v614
        %628 = vmatpush.msra.mxu0 %v613
        %629 = vmatpush.msra.mxu0 %v612
        %630 = vmatpush.msra.mxu0 %v611
        %631 = vmatpush.msra.mxu0 %v610
        %632 = vmatpush.msra.mxu0 %v609
        %633 = vmatpush.msra.mxu0 %v608
        %634 = vmatpush.msra.mxu0 %v607
        %635 = vmatpush.msra.mxu0 %v606
        %636 = vmatpush.msra.mxu0 %v605
        %637 = vmatpush.msra.mxu0 %v604
        %638 = vmatpush.msra.mxu0 %v603
        %639 = vmatmul.f32.gmra.mxu0 %v556
        %v640 = vpop.f32.mrf.mxu0
        %v641 = vadd.f32 %v621, %v640
        %642 = vmatmul.f32.gmra.mxu0 %v557
        %v643 = vpop.f32.mrf.mxu0
        %v644 = vadd.f32 %v621, %v643
        %645 = vdwg.mxu0
        %v646 = vld [vmem:[#allocation12] sm:$0xff]
        %v647 = vld [vmem:[#allocation12 + $0x8] sm:$0xff]
        %v648 = vld [vmem:[#allocation12 + $0x10] sm:$0xff]
        %v649 = vld [vmem:[#allocation12 + $0x18] sm:$0xff]
        %v650 = vld [vmem:[#allocation12 + $0x20] sm:$0xff]
        %v651 = vld [vmem:[#allocation12 + $0x28] sm:$0xff]
        %v652 = vld [vmem:[#allocation12 + $0x30] sm:$0xff]
        %v653 = vld [vmem:[#allocation12 + $0x38] sm:$0xff]
        %v654 = vld [vmem:[#allocation12 + $0x40] sm:$0xff]
        %v655 = vld [vmem:[#allocation12 + $0x48] sm:$0xff]
        %v656 = vld [vmem:[#allocation12 + $0x50] sm:$0xff]
        %v657 = vld [vmem:[#allocation12 + $0x58] sm:$0xff]
        %v658 = vld [vmem:[#allocation12 + $0x60] sm:$0xff]
        %v659 = vld [vmem:[#allocation12 + $0x68] sm:$0xff]
        %v660 = vld [vmem:[#allocation12 + $0x70] sm:$0xff]
        %v661 = vld [vmem:[#allocation12 + $0x78] sm:$0xff]
        %v662 = vld [vmem:[%s8] sm:$0x1]
        %v664 = vperm.slane %v662, 0
        %666 = vmatpush.msra.mxu0 %v661
        %667 = vmatpush.msra.mxu0 %v660
        %668 = vmatpush.msra.mxu0 %v659
        %669 = vmatpush.msra.mxu0 %v658
        %670 = vmatpush.msra.mxu0 %v657
        %671 = vmatpush.msra.mxu0 %v656
        %672 = vmatpush.msra.mxu0 %v655
        %673 = vmatpush.msra.mxu0 %v654
        %674 = vmatpush.msra.mxu0 %v653
        %675 = vmatpush.msra.mxu0 %v652
        %676 = vmatpush.msra.mxu0 %v651
        %677 = vmatpush.msra.mxu0 %v650
        %678 = vmatpush.msra.mxu0 %v649
        %679 = vmatpush.msra.mxu0 %v648
        %680 = vmatpush.msra.mxu0 %v647
        %681 = vmatpush.msra.mxu0 %v646
        %682 = vmatmul.f32.gmra.mxu0 %v558
        %v683 = vpop.f32.mrf.mxu0
        %v684 = vadd.f32 %v664, %v683
        %685 = vmatmul.f32.gmra.mxu0 %v559
        %v686 = vpop.f32.mrf.mxu0
        %v687 = vadd.f32 %v664, %v686
        %688 = vdwg.mxu0
        %vm689 = vcmask 261120
        %v691 = vsel %vm689, %v598, 0
        %v694 = vsel %vm689, %v601, 0
        %v697 = vsel %vm689, %v641, 0
        %v700 = vsel %vm689, %v644, 0
        %702 = vmatpush.xpose.msra.mxu0 0.0
        %703 = vmatpush.xpose.msra.mxu0 0.0
        %704 = vmatpush.xpose.msra.mxu0 0.0
        %705 = vmatpush.xpose.msra.mxu0 0.0
        %706 = vmatpush.xpose.msra.mxu0 0.0
        %707 = vmatpush.xpose.msra.mxu0 0.0
        %708 = vmatpush.xpose.msra.mxu0 0.0
        %709 = vmatpush.xpose.msra.mxu0 0.0
        %710 = vmatpush.xpose.msra.mxu0 0.0
        %711 = vmatpush.xpose.msra.mxu0 0.0
        %712 = vmatpush.xpose.msra.mxu0 0.0
        %713 = vmatpush.xpose.msra.mxu0 0.0
        %714 = vmatpush.xpose.msra.mxu0 0.0
        %715 = vmatpush.xpose.msra.mxu0 0.0
        %716 = vmatpush.xpose.msra.mxu0 %v700
        %717 = vmatpush.xpose.msra.mxu0 %v697
        %718 = vmatmul.f32.gmra.mxu0 %v691
        %v719 = vpop.f32.mrf.mxu0
        %v720 = vadd.f32 0.0, %v719
        %721 = vmatmul.f32.gmra.mxu0 %v694
        %v722 = vpop.f32.mrf.mxu0
        %v723 = vadd.f32 0.0, %v722
        %724 = vdwg.mxu0
        %vm725 = vcmask 130048
        %v726 = vsel %vm725, %v720, -inf
        %727 = vmax.xlane.f32.xlu0 %v726
        %v728 = vpop.xlane.xlu0 %727
        %v729 = vsel %vm725, %v723, -inf
        %730 = vmax.xlane.f32.xlu0 %v729
        %v731 = vpop.xlane.xlu0 %730
        %v732 = vsub.f32 %v720, %v728
        %v733 = vsub.f32 %v723, %v731
        %v734 = vmul.f32 %v732, 1.442695
        %v735 = vpow.pop %v734
        %v736 = vmul.f32 %v733, 1.442695
        %v737 = vpow.pop %v736
        %v738 = vsel %vm725, %v735, 0.0
        %739 = vadd.xlane.f32.xlu0 %v738
        %v740 = vpop.xlane.xlu0 %739
        %v741 = vsel %vm725, %v737, 0.0
        %742 = vadd.xlane.f32.xlu0 %v741
        %v743 = vpop.xlane.xlu0 %742
        %v745 = vsel %vm725, %v735, 0
        %v748 = vsel %vm725, %v737, 0
        %750 = vmatpush.msra.mxu0 0.0
        %751 = vmatpush.msra.mxu0 0.0
        %752 = vmatpush.msra.mxu0 0.0
        %753 = vmatpush.msra.mxu0 0.0
        %754 = vmatpush.msra.mxu0 0.0
        %755 = vmatpush.msra.mxu0 0.0
        %756 = vmatpush.msra.mxu0 0.0
        %757 = vmatpush.msra.mxu0 0.0
        %758 = vmatpush.msra.mxu0 0.0
        %759 = vmatpush.msra.mxu0 0.0
        %760 = vmatpush.msra.mxu0 0.0
        %761 = vmatpush.msra.mxu0 0.0
        %762 = vmatpush.msra.mxu0 0.0
        %763 = vmatpush.msra.mxu0 0.0
        %764 = vmatpush.msra.mxu0 %v687
        %765 = vmatpush.msra.mxu0 %v684
        %766 = vmatmul.f32.gmra.mxu0 %v745
        %v767 = vpop.f32.mrf.mxu0
        %v768 = vadd.f32 0.0, %v767
        %769 = vmatmul.f32.gmra.mxu0 %v748
        %v770 = vpop.f32.mrf.mxu0
        %v771 = vadd.f32 0.0, %v770
        %772 = vdwg.mxu0
        %v773 = vrcp.pop %v740
        %v774 = vmul.f32 %v740, %v773
        %v775 = vsub.f32 1.0, %v774
        %v776 = vmul.f32 %v773, %v775
        %v777 = vadd.f32 %v773, %v776
        %vm778 = vweird.f32 %v740
        %vm779 = vweird.f32 %v773
        %vm780 = vmor %vm778, %vm779
        %v781 = vsel %vm780, %v773, %v777
        %v782 = vand.u32 2147483647, %v740
        %vm783 = vcmp.eq.f32.partialorder %v782, 8.507059e+37
        %v784 = vand.u32 %v740, 2147483648
        %v785 = vor.u32 1.1754944e-38, %v784
        %v786 = vsel %vm783, %v785, %v781
        %v787 = vmul.f32 1.0, %v786
        %v788 = vrcp.pop %v743
        %v789 = vmul.f32 %v743, %v788
        %v790 = vsub.f32 1.0, %v789
        %v791 = vmul.f32 %v788, %v790
        %v792 = vadd.f32 %v788, %v791
        %vm793 = vweird.f32 %v743
        %vm794 = vweird.f32 %v788
        %vm795 = vmor %vm793, %vm794
        %v796 = vsel %vm795, %v788, %v792
        %v797 = vand.u32 2147483647, %v743
        %vm798 = vcmp.eq.f32.partialorder %v797, 8.507059e+37
        %v799 = vand.u32 %v743, 2147483648
        %v800 = vor.u32 1.1754944e-38, %v799
        %v801 = vsel %vm798, %v800, %v796
        %v802 = vmul.f32 1.0, %v801
        %v803 = vmul.f32 %v768, %v787
        %v804 = vmul.f32 %v771, %v802
        %805 = vst.msk [vmem:[#allocation2] sm:$0xff] %vm689, %v803
        %806 = vst.msk [vmem:[#allocation2 + $0x8] sm:$0xff] %vm689, %v804
        %807 = vrot.lane.b32.xlu0 %v598, 96
        %v808 = vpop.permute.xlu0 %807
        %809 = vrot.lane.b32.xlu0 %v601, 96
        %v810 = vpop.permute.xlu0 %809
        %811 = vrot.lane.b32.xlu0 %v641, 96
        %v812 = vpop.permute.xlu0 %811
        %813 = vrot.lane.b32.xlu0 %v644, 96
        %v814 = vpop.permute.xlu0 %813
        %v815 = vsel %vm689, %v808, 0
        %v817 = vsel %vm689, %v810, 0
        %v819 = vsel %vm689, %v812, 0
        %v821 = vsel %vm689, %v814, 0
        %823 = vmatpush.xpose.msra.mxu0 0.0
        %824 = vmatpush.xpose.msra.mxu0 0.0
        %825 = vmatpush.xpose.msra.mxu0 0.0
        %826 = vmatpush.xpose.msra.mxu0 0.0
        %827 = vmatpush.xpose.msra.mxu0 0.0
        %828 = vmatpush.xpose.msra.mxu0 0.0
        %829 = vmatpush.xpose.msra.mxu0 0.0
        %830 = vmatpush.xpose.msra.mxu0 0.0
        %831 = vmatpush.xpose.msra.mxu0 0.0
        %832 = vmatpush.xpose.msra.mxu0 0.0
        %833 = vmatpush.xpose.msra.mxu0 0.0
        %834 = vmatpush.xpose.msra.mxu0 0.0
        %835 = vmatpush.xpose.msra.mxu0 0.0
        %836 = vmatpush.xpose.msra.mxu0 0.0
        %837 = vmatpush.xpose.msra.mxu0 %v821
        %838 = vmatpush.xpose.msra.mxu0 %v819
        %839 = vmatmul.f32.gmra.mxu0 %v815
        %v840 = vpop.f32.mrf.mxu0
        %v841 = vadd.f32 0.0, %v840
        %842 = vmatmul.f32.gmra.mxu0 %v817
        %v843 = vpop.f32.mrf.mxu0
        %v844 = vadd.f32 0.0, %v843
        %845 = vdwg.mxu0
        %v846 = vsel %vm725, %v841, -inf
        %847 = vmax.xlane.f32.xlu0 %v846
        %v848 = vpop.xlane.xlu0 %847
        %v849 = vsel %vm725, %v844, -inf
        %850 = vmax.xlane.f32.xlu0 %v849
        %v851 = vpop.xlane.xlu0 %850
        %v852 = vsub.f32 %v841, %v848
        %v853 = vsub.f32 %v844, %v851
        %v854 = vmul.f32 %v852, 1.442695
        %v855 = vpow.pop %v854
        %v856 = vmul.f32 %v853, 1.442695
        %v857 = vpow.pop %v856
        %v858 = vsel %vm725, %v855, 0.0
        %859 = vadd.xlane.f32.xlu0 %v858
        %v860 = vpop.xlane.xlu0 %859
        %v861 = vsel %vm725, %v857, 0.0
        %862 = vadd.xlane.f32.xlu0 %v861
        %v863 = vpop.xlane.xlu0 %862
        %866 = vrot.lane.b32.xlu0 %v684, 96
        %v867 = vpop.permute.xlu0 %866
        %868 = vrot.lane.b32.xlu0 %v687, 96
        %v869 = vpop.permute.xlu0 %868
        %v873 = vsel %vm725, %v855, 0
        %v876 = vsel %vm725, %v857, 0
        %878 = vmatpush.msra.mxu0 0.0
        %879 = vmatpush.msra.mxu0 0.0
        %880 = vmatpush.msra.mxu0 0.0
        %881 = vmatpush.msra.mxu0 0.0
        %882 = vmatpush.msra.mxu0 0.0
        %883 = vmatpush.msra.mxu0 0.0
        %884 = vmatpush.msra.mxu0 0.0
        %885 = vmatpush.msra.mxu0 0.0
        %886 = vmatpush.msra.mxu0 0.0
        %887 = vmatpush.msra.mxu0 0.0
        %888 = vmatpush.msra.mxu0 0.0
        %889 = vmatpush.msra.mxu0 0.0
        %890 = vmatpush.msra.mxu0 0.0
        %891 = vmatpush.msra.mxu0 0.0
        %892 = vmatpush.msra.mxu0 %v869
        %893 = vmatpush.msra.mxu0 %v867
        %894 = vmatmul.f32.gmra.mxu0 %v873
        %v895 = vpop.f32.mrf.mxu0
        %v896 = vadd.f32 0.0, %v895
        %897 = vmatmul.f32.gmra.mxu0 %v876
        %v898 = vpop.f32.mrf.mxu0
        %v899 = vadd.f32 0.0, %v898
        %900 = vdwg.mxu0
        %v901 = vrcp.pop %v860
        %v902 = vmul.f32 %v860, %v901
        %v903 = vsub.f32 1.0, %v902
        %v904 = vmul.f32 %v901, %v903
        %v905 = vadd.f32 %v901, %v904
        %vm906 = vweird.f32 %v860
        %vm907 = vweird.f32 %v901
        %vm908 = vmor %vm906, %vm907
        %v909 = vsel %vm908, %v901, %v905
        %v910 = vand.u32 2147483647, %v860
        %vm911 = vcmp.eq.f32.partialorder %v910, 8.507059e+37
        %v912 = vand.u32 %v860, 2147483648
        %v913 = vor.u32 1.1754944e-38, %v912
        %v914 = vsel %vm911, %v913, %v909
        %v915 = vmul.f32 1.0, %v914
        %v916 = vrcp.pop %v863
        %v917 = vmul.f32 %v863, %v916
        %v918 = vsub.f32 1.0, %v917
        %v919 = vmul.f32 %v916, %v918
        %v920 = vadd.f32 %v916, %v919
        %vm921 = vweird.f32 %v863
        %vm922 = vweird.f32 %v916
        %vm923 = vmor %vm921, %vm922
        %v924 = vsel %vm923, %v916, %v920
        %v925 = vand.u32 2147483647, %v863
        %vm926 = vcmp.eq.f32.partialorder %v925, 8.507059e+37
        %v927 = vand.u32 %v863, 2147483648
        %v928 = vor.u32 1.1754944e-38, %v927
        %v929 = vsel %vm926, %v928, %v924
        %v930 = vmul.f32 1.0, %v929
        %v931 = vmul.f32 %v896, %v915
        %v932 = vmul.f32 %v899, %v930
        %935 = vrot.lane.b32.xlu0 %v931, 32
        %v936 = vpop.permute.xlu0 %935
        %937 = vrot.lane.b32.xlu0 %v932, 32
        %v938 = vpop.permute.xlu0 %937
        %vm941 = vcmask 523520
        %942 = vst.msk [vmem:[#allocation2] sm:$0xff] %vm941, %v936
        %943 = vst.msk [vmem:[#allocation2 + $0x8] sm:$0xff] %vm941, %v938
        %944 = vrot.lane.b32.xlu0 %v598, 64
        %v945 = vpop.permute.xlu0 %944
        %946 = vrot.lane.b32.xlu0 %v601, 64
        %v947 = vpop.permute.xlu0 %946
        %948 = vrot.lane.b32.xlu0 %v641, 64
        %v949 = vpop.permute.xlu0 %948
        %950 = vrot.lane.b32.xlu0 %v644, 64
        %v951 = vpop.permute.xlu0 %950
        %v952 = vsel %vm689, %v945, 0
        %v954 = vsel %vm689, %v947, 0
        %v956 = vsel %vm689, %v949, 0
        %v958 = vsel %vm689, %v951, 0
        %960 = vmatpush.xpose.msra.mxu0 0.0
        %961 = vmatpush.xpose.msra.mxu0 0.0
        %962 = vmatpush.xpose.msra.mxu0 0.0
        %963 = vmatpush.xpose.msra.mxu0 0.0
        %964 = vmatpush.xpose.msra.mxu0 0.0
        %965 = vmatpush.xpose.msra.mxu0 0.0
        %966 = vmatpush.xpose.msra.mxu0 0.0
        %967 = vmatpush.xpose.msra.mxu0 0.0
        %968 = vmatpush.xpose.msra.mxu0 0.0
        %969 = vmatpush.xpose.msra.mxu0 0.0
        %970 = vmatpush.xpose.msra.mxu0 0.0
        %971 = vmatpush.xpose.msra.mxu0 0.0
        %972 = vmatpush.xpose.msra.mxu0 0.0
        %973 = vmatpush.xpose.msra.mxu0 0.0
        %974 = vmatpush.xpose.msra.mxu0 %v958
        %975 = vmatpush.xpose.msra.mxu0 %v956
        %976 = vmatmul.f32.gmra.mxu0 %v952
        %v977 = vpop.f32.mrf.mxu0
        %v978 = vadd.f32 0.0, %v977
        %979 = vmatmul.f32.gmra.mxu0 %v954
        %v980 = vpop.f32.mrf.mxu0
        %v981 = vadd.f32 0.0, %v980
        %982 = vdwg.mxu0
        %v983 = vsel %vm725, %v978, -inf
        %984 = vmax.xlane.f32.xlu0 %v983
        %v985 = vpop.xlane.xlu0 %984
        %v986 = vsel %vm725, %v981, -inf
        %987 = vmax.xlane.f32.xlu0 %v986
        %v988 = vpop.xlane.xlu0 %987
        %v989 = vsub.f32 %v978, %v985
        %v990 = vsub.f32 %v981, %v988
        %v991 = vmul.f32 %v989, 1.442695
        %v992 = vpow.pop %v991
        %v993 = vmul.f32 %v990, 1.442695
        %v994 = vpow.pop %v993
        %v995 = vsel %vm725, %v992, 0.0
        %996 = vadd.xlane.f32.xlu0 %v995
        %v997 = vpop.xlane.xlu0 %996
        %v998 = vsel %vm725, %v994, 0.0
        %999 = vadd.xlane.f32.xlu0 %v998
        %v1000 = vpop.xlane.xlu0 %999
        %1001 = vrot.lane.b32.xlu0 %v684, 64
        %v1002 = vpop.permute.xlu0 %1001
        %1003 = vrot.lane.b32.xlu0 %v687, 64
        %v1004 = vpop.permute.xlu0 %1003
        %v1008 = vsel %vm725, %v992, 0
        %v1011 = vsel %vm725, %v994, 0
        %1013 = vmatpush.msra.mxu0 0.0
        %1014 = vmatpush.msra.mxu0 0.0
        %1015 = vmatpush.msra.mxu0 0.0
        %1016 = vmatpush.msra.mxu0 0.0
        %1017 = vmatpush.msra.mxu0 0.0
        %1018 = vmatpush.msra.mxu0 0.0
        %1019 = vmatpush.msra.mxu0 0.0
        %1020 = vmatpush.msra.mxu0 0.0
        %1021 = vmatpush.msra.mxu0 0.0
        %1022 = vmatpush.msra.mxu0 0.0
        %1023 = vmatpush.msra.mxu0 0.0
        %1024 = vmatpush.msra.mxu0 0.0
        %1025 = vmatpush.msra.mxu0 0.0
        %1026 = vmatpush.msra.mxu0 0.0
        %1027 = vmatpush.msra.mxu0 %v1004
        %1028 = vmatpush.msra.mxu0 %v1002
        %1029 = vmatmul.f32.gmra.mxu0 %v1008
        %v1030 = vpop.f32.mrf.mxu0
        %v1031 = vadd.f32 0.0, %v1030
        %1032 = vmatmul.f32.gmra.mxu0 %v1011
        %v1033 = vpop.f32.mrf.mxu0
        %v1034 = vadd.f32 0.0, %v1033
        %1035 = vdwg.mxu0
        %v1036 = vrcp.pop %v997
        %v1037 = vmul.f32 %v997, %v1036
        %v1038 = vsub.f32 1.0, %v1037
        %v1039 = vmul.f32 %v1036, %v1038
        %v1040 = vadd.f32 %v1036, %v1039
        %vm1041 = vweird.f32 %v997
        %vm1042 = vweird.f32 %v1036
        %vm1043 = vmor %vm1041, %vm1042
        %v1044 = vsel %vm1043, %v1036, %v1040
        %v1045 = vand.u32 2147483647, %v997
        %vm1046 = vcmp.eq.f32.partialorder %v1045, 8.507059e+37
        %v1047 = vand.u32 %v997, 2147483648
        %v1048 = vor.u32 1.1754944e-38, %v1047
        %v1049 = vsel %vm1046, %v1048, %v1044
        %v1050 = vmul.f32 1.0, %v1049
        %v1051 = vrcp.pop %v1000
        %v1052 = vmul.f32 %v1000, %v1051
        %v1053 = vsub.f32 1.0, %v1052
        %v1054 = vmul.f32 %v1051, %v1053
        %v1055 = vadd.f32 %v1051, %v1054
        %vm1056 = vweird.f32 %v1000
        %vm1057 = vweird.f32 %v1051
        %vm1058 = vmor %vm1056, %vm1057
        %v1059 = vsel %vm1058, %v1051, %v1055
        %v1060 = vand.u32 2147483647, %v1000
        %vm1061 = vcmp.eq.f32.partialorder %v1060, 8.507059e+37
        %v1062 = vand.u32 %v1000, 2147483648
        %v1063 = vor.u32 1.1754944e-38, %v1062
        %v1064 = vsel %vm1061, %v1063, %v1059
        %v1065 = vmul.f32 1.0, %v1064
        %v1066 = vmul.f32 %v1031, %v1050
        %v1067 = vmul.f32 %v1034, %v1065
        %1070 = vrot.lane.b32.xlu0 %v1066, 64
        %v1071 = vpop.permute.xlu0 %1070
        %1072 = vrot.lane.b32.xlu0 %v1067, 64
        %v1073 = vpop.permute.xlu0 %1072
        %vm1076 = vcmask 785920
        %1077 = vst.msk [vmem:[#allocation2] sm:$0xff] %vm1076, %v1071
        %1078 = vst.msk [vmem:[#allocation2 + $0x8] sm:$0xff] %vm1076, %v1073
        %1079 = vrot.lane.b32.xlu0 %v598, 32
        %v1080 = vpop.permute.xlu0 %1079
        %1081 = vrot.lane.b32.xlu0 %v601, 32
        %v1082 = vpop.permute.xlu0 %1081
        %1083 = vrot.lane.b32.xlu0 %v641, 32
        %v1084 = vpop.permute.xlu0 %1083
        %1085 = vrot.lane.b32.xlu0 %v644, 32
        %v1086 = vpop.permute.xlu0 %1085
        %v1087 = vsel %vm689, %v1080, 0
        %v1089 = vsel %vm689, %v1082, 0
        %v1091 = vsel %vm689, %v1084, 0
        %v1093 = vsel %vm689, %v1086, 0
        %1095 = vmatpush.xpose.msra.mxu0 0.0
        %1096 = vmatpush.xpose.msra.mxu0 0.0
        %1097 = vmatpush.xpose.msra.mxu0 0.0
        %1098 = vmatpush.xpose.msra.mxu0 0.0
        %1099 = vmatpush.xpose.msra.mxu0 0.0
        %1100 = vmatpush.xpose.msra.mxu0 0.0
        %1101 = vmatpush.xpose.msra.mxu0 0.0
        %1102 = vmatpush.xpose.msra.mxu0 0.0
        %1103 = vmatpush.xpose.msra.mxu0 0.0
        %1104 = vmatpush.xpose.msra.mxu0 0.0
        %1105 = vmatpush.xpose.msra.mxu0 0.0
        %1106 = vmatpush.xpose.msra.mxu0 0.0
        %1107 = vmatpush.xpose.msra.mxu0 0.0
        %1108 = vmatpush.xpose.msra.mxu0 0.0
        %1109 = vmatpush.xpose.msra.mxu0 %v1093
        %1110 = vmatpush.xpose.msra.mxu0 %v1091
        %1111 = vmatmul.f32.gmra.mxu0 %v1087
        %v1112 = vpop.f32.mrf.mxu0
        %v1113 = vadd.f32 0.0, %v1112
        %1114 = vmatmul.f32.gmra.mxu0 %v1089
        %v1115 = vpop.f32.mrf.mxu0
        %v1116 = vadd.f32 0.0, %v1115
        %1117 = vdwg.mxu0
        %v1118 = vsel %vm725, %v1113, -inf
        %1119 = vmax.xlane.f32.xlu0 %v1118
        %v1120 = vpop.xlane.xlu0 %1119
        %v1121 = vsel %vm725, %v1116, -inf
        %1122 = vmax.xlane.f32.xlu0 %v1121
        %v1123 = vpop.xlane.xlu0 %1122
        %v1124 = vsub.f32 %v1113, %v1120
        %v1125 = vsub.f32 %v1116, %v1123
        %v1126 = vmul.f32 %v1124, 1.442695
        %v1127 = vpow.pop %v1126
        %v1128 = vmul.f32 %v1125, 1.442695
        %v1129 = vpow.pop %v1128
        %v1130 = vsel %vm725, %v1127, 0.0
        %1131 = vadd.xlane.f32.xlu0 %v1130
        %v1132 = vpop.xlane.xlu0 %1131
        %v1133 = vsel %vm725, %v1129, 0.0
        %1134 = vadd.xlane.f32.xlu0 %v1133
        %v1135 = vpop.xlane.xlu0 %1134
        %1136 = vrot.lane.b32.xlu0 %v684, 32
        %v1137 = vpop.permute.xlu0 %1136
        %1138 = vrot.lane.b32.xlu0 %v687, 32
        %v1139 = vpop.permute.xlu0 %1138
        %v1143 = vsel %vm725, %v1127, 0
        %v1146 = vsel %vm725, %v1129, 0
        %1148 = vmatpush.msra.mxu0 0.0
        %1149 = vmatpush.msra.mxu0 0.0
        %1150 = vmatpush.msra.mxu0 0.0
        %1151 = vmatpush.msra.mxu0 0.0
        %1152 = vmatpush.msra.mxu0 0.0
        %1153 = vmatpush.msra.mxu0 0.0
        %1154 = vmatpush.msra.mxu0 0.0
        %1155 = vmatpush.msra.mxu0 0.0
        %1156 = vmatpush.msra.mxu0 0.0
        %1157 = vmatpush.msra.mxu0 0.0
        %1158 = vmatpush.msra.mxu0 0.0
        %1159 = vmatpush.msra.mxu0 0.0
        %1160 = vmatpush.msra.mxu0 0.0
        %1161 = vmatpush.msra.mxu0 0.0
        %1162 = vmatpush.msra.mxu0 %v1139
        %1163 = vmatpush.msra.mxu0 %v1137
        %1164 = vmatmul.f32.gmra.mxu0 %v1143
        %v1165 = vpop.f32.mrf.mxu0
        %v1166 = vadd.f32 0.0, %v1165
        %1167 = vmatmul.f32.gmra.mxu0 %v1146
        %v1168 = vpop.f32.mrf.mxu0
        %v1169 = vadd.f32 0.0, %v1168
        %1170 = vdwg.mxu0
        %v1171 = vrcp.pop %v1132
        %v1172 = vmul.f32 %v1132, %v1171
        %v1173 = vsub.f32 1.0, %v1172
        %v1174 = vmul.f32 %v1171, %v1173
        %v1175 = vadd.f32 %v1171, %v1174
        %vm1176 = vweird.f32 %v1132
        %vm1177 = vweird.f32 %v1171
        %vm1178 = vmor %vm1176, %vm1177
        %v1179 = vsel %vm1178, %v1171, %v1175
        %v1180 = vand.u32 2147483647, %v1132
        %vm1181 = vcmp.eq.f32.partialorder %v1180, 8.507059e+37
        %v1182 = vand.u32 %v1132, 2147483648
        %v1183 = vor.u32 1.1754944e-38, %v1182
        %v1184 = vsel %vm1181, %v1183, %v1179
        %v1185 = vmul.f32 1.0, %v1184
        %v1186 = vrcp.pop %v1135
        %v1187 = vmul.f32 %v1135, %v1186
        %v1188 = vsub.f32 1.0, %v1187
        %v1189 = vmul.f32 %v1186, %v1188
        %v1190 = vadd.f32 %v1186, %v1189
        %vm1191 = vweird.f32 %v1135
        %vm1192 = vweird.f32 %v1186
        %vm1193 = vmor %vm1191, %vm1192
        %v1194 = vsel %vm1193, %v1186, %v1190
        %v1195 = vand.u32 2147483647, %v1135
        %vm1196 = vcmp.eq.f32.partialorder %v1195, 8.507059e+37
        %v1197 = vand.u32 %v1135, 2147483648
        %v1198 = vor.u32 1.1754944e-38, %v1197
        %v1199 = vsel %vm1196, %v1198, %v1194
        %v1200 = vmul.f32 1.0, %v1199
        %v1201 = vmul.f32 %v1166, %v1185
        %v1202 = vmul.f32 %v1169, %v1200
        %1205 = vrot.lane.b32.xlu0 %v1201, 96
        %v1206 = vpop.permute.xlu0 %1205
        %1207 = vrot.lane.b32.xlu0 %v1202, 96
        %v1208 = vpop.permute.xlu0 %1207
        %vm1211 = vcmask 1048320
        %1212 = vst.msk [vmem:[#allocation2] sm:$0xff] %vm1211, %v1206
        %1213 = vst.msk [vmem:[#allocation2 + $0x8] sm:$0xff] %vm1211, %v1208
        %v1214 = vld [vmem:[#allocation2] sm:$0xff]
        %v1215 = vld [vmem:[#allocation2 + $0x8] sm:$0xff]
        %v1216 = vld [vmem:[#allocation14] sm:$0xff]
        %v1217 = vld [vmem:[#allocation14 + $0x8] sm:$0xff]
        %v1218 = vld [vmem:[#allocation14 + $0x10] sm:$0xff]
        %v1219 = vld [vmem:[#allocation14 + $0x18] sm:$0xff]
        %v1220 = vld [vmem:[#allocation14 + $0x20] sm:$0xff]
        %v1221 = vld [vmem:[#allocation14 + $0x28] sm:$0xff]
        %v1222 = vld [vmem:[#allocation14 + $0x30] sm:$0xff]
        %v1223 = vld [vmem:[#allocation14 + $0x38] sm:$0xff]
        %v1224 = vld [vmem:[#allocation14 + $0x40] sm:$0xff]
        %v1225 = vld [vmem:[#allocation14 + $0x48] sm:$0xff]
        %v1226 = vld [vmem:[#allocation14 + $0x50] sm:$0xff]
        %v1227 = vld [vmem:[#allocation14 + $0x58] sm:$0xff]
        %v1228 = vld [vmem:[#allocation14 + $0x60] sm:$0xff]
        %v1229 = vld [vmem:[#allocation14 + $0x68] sm:$0xff]
        %v1230 = vld [vmem:[#allocation14 + $0x70] sm:$0xff]
        %v1231 = vld [vmem:[#allocation14 + $0x78] sm:$0xff]
        %v1232 = vld [vmem:[%s10] sm:$0x1]
        %v1234 = vperm.slane %v1232, 0
        %1236 = vmatpush.msra.mxu0 %v1231
        %1237 = vmatpush.msra.mxu0 %v1230
        %1238 = vmatpush.msra.mxu0 %v1229
        %1239 = vmatpush.msra.mxu0 %v1228
        %1240 = vmatpush.msra.mxu0 %v1227
        %1241 = vmatpush.msra.mxu0 %v1226
        %1242 = vmatpush.msra.mxu0 %v1225
        %1243 = vmatpush.msra.mxu0 %v1224
        %1244 = vmatpush.msra.mxu0 %v1223
        %1245 = vmatpush.msra.mxu0 %v1222
        %1246 = vmatpush.msra.mxu0 %v1221
        %1247 = vmatpush.msra.mxu0 %v1220
        %1248 = vmatpush.msra.mxu0 %v1219
        %1249 = vmatpush.msra.mxu0 %v1218
        %1250 = vmatpush.msra.mxu0 %v1217
        %1251 = vmatpush.msra.mxu0 %v1216
        %1252 = vmatmul.f32.gmra.mxu0 %v1214
        %v1253 = vpop.f32.mrf.mxu0
        %v1254 = vadd.f32 %v1234, %v1253
        %1255 = vmatmul.f32.gmra.mxu0 %v1215
        %v1256 = vpop.f32.mrf.mxu0
        %v1257 = vadd.f32 %v1234, %v1256
        %1258 = vdwg.mxu0
        %1259 = vst [vmem:[%s553] sm:$0xff] %v1254
        %1260 = vst [vmem:[%s553 + $0x8] sm:$0xff] %v1257
        %s1261 = sand.u32 %s287, 1
        %s1262 = scalar_lea.sflag [#allocation5], %s1261
        %s1263 = sand.u32 %s287, 1
        %s1264 = smul.addr %s1263, 16
        %s1265 = scalar_lea.vmem [#allocation15], %s1264
        // Predicated region
        $region93: #{tpu_custom_call.1} parent=63 // pred_check
          %p1266 = pneg %p297
        $region94: #{tpu_custom_call.1} parent=63 // pred_check_branch
          %1268 = sbr.rel (%p1266) target = $region96
        $region95: #{tpu_custom_call.1} parent=63 // pred_region
          %1270 = vsyncadd %s1262, 0
          %s1271 = smul.addr %s33, 2
          %s1272 = smul.addr %s1271, 8
          %s1273 = scalar_lea.hbm %s11, %s1272
          %s1274 = sshll.u32 %s1265, 4
          %s1275 = int_to_ptr.vmem [resolvable:$true] %s1274
          %s1276 = sshll.u32 %s1273, 4
          %s1277 = int_to_ptr.hbm [resolvable:$true] %s1276
          %1282 = dma.vmem_to_hbm [thread:$0]  %s1275, 256, %s1277, %s1262, 128, 128, 8
        $region96: #{tpu_custom_call.1} parent=63 // pred_fallthru
          _
      $region64: #{tpu_custom_call.1} parent=5 // pred_fallthru
        _
      %p1283 = scmp.le.s32.totalorder 2, %s28
      // Predicated region
      $region97: #{tpu_custom_call.1} parent=5 // pred_check
        %p1284 = pneg %p1283
      $region98: #{tpu_custom_call.1} parent=5 // pred_check_branch
        %1286 = sbr.rel (%p1284) target = $region100
      $region99: #{tpu_custom_call.1} parent=5 // pred_region
        %s1287 = ssub.s32 %s28, 2
        // Predicated region
        $region101: #{tpu_custom_call.1} parent=99 // pred_check
          %p1288 = pneg %p303
        $region102: #{tpu_custom_call.1} parent=99 // pred_check_branch
          %1290 = sbr.rel (%p1288) target = $region104
        $region103: #{tpu_custom_call.1} parent=99 // pred_region
          %s1291 = sand.u32 %s288, 1
          %s1292 = scalar_lea.sflag [#allocation5], %s1291
          %s1293 = sand.u32 %s288, 1
          %s1294 = smul.addr %s1293, 16
          %s1295 = scalar_lea.vmem [#allocation15], %s1294
          %1297 = dma.done %s1292, 256
        $region104: #{tpu_custom_call.1} parent=99 // pred_fallthru
          _
      $region100: #{tpu_custom_call.1} parent=5 // pred_fallthru
        _
    $region6: #{tpu_custom_call.1} parent=1 // loop_footer
      %s32 = sadd.s32 1, %s28
    $region7: #{tpu_custom_call.1} parent=1 // loop_footer_branch
      %27 = sbr.rel target = $region3
    $region8: #{tpu_custom_call.1} parent=1 // loop_exit
      _
    %1298 = vsyncpa [#allocation4], 1
    %s1299 = scalar_lea.sflag [#allocation4], 1
    %1300 = vsyncpa %s1299, 1
    %1301 = vsyncpa [#allocation7], 1
    %s1302 = scalar_lea.sflag [#allocation7], 1
    %1303 = vsyncpa %s1302, 1
    %1304 = vsyncpa [#allocation10], 1
    %1305 = vsyncpa [#allocation13], 1
    %1306 = vsyncpa [#allocation5], 1
    %s1307 = scalar_lea.sflag [#allocation5], 1
    %1308 = vsyncpa %s1307, 1

</llo_original>
